<compile_context>
chip_gen: v5e
topology: v5e:2x2
jax: 0.10.0
libtpu: 0.0.40
codegen_flags: <defaults>
</compile_context>

<pallas_src>
import functools

import jax
import jax.numpy as jnp
from jax.experimental import pallas as pl
from jax.experimental.pallas import tpu as pltpu  # noqa: F401  (TPU backend)

# ---- model definition (small, deterministic) --------------------------------
D_MODEL = 32
NUM_HEADS = 4
DIM_FF = 64
NUM_LAYERS = 2
SEQ = 8
BATCH = 2
NEG_INF = -1e30
LN_EPS = 1e-5


def _layernorm(x, gamma, beta, eps=LN_EPS):
    mean = jnp.mean(x, axis=-1, keepdims=True)
    var = jnp.mean((x - mean) ** 2, axis=-1, keepdims=True)
    return (x - mean) * jax.lax.rsqrt(var + eps) * gamma + beta


# ---- single fused kernel: all layers + final norm ---------------------------
def fused_encoder_kernel(x_ref, kpm_ref,
                         wqkv_ref, wo_ref, w1_ref, w2_ref,
                         vecs_ref, fnorm_ref,
                         o_ref,
                         *, num_heads, batch, seq, apply_final_norm):
    N, D = x_ref.shape                       # N = B * T
    L = wqkv_ref.shape[0]
    F_ = w1_ref.shape[2]
    H = num_heads
    hd = D // H
    scale = 1.0 / float(hd) ** 0.5

    x = x_ref[...].astype(jnp.float32)       # (N, D) — resident across layers
    kpm = kpm_ref[...].astype(jnp.float32)   # (B*H, 1, T) additive key-pad mask

    for l in range(L):                       # static layer loop (fully fused)
        wqkv = wqkv_ref[l]                   # (D, 3D)  pre-transposed on host
        wo = wo_ref[l]                       # (D, D)
        w1 = w1_ref[l]                       # (D, F)
        w2 = w2_ref[l]                       # (F, D)
        vec = vecs_ref[l]                    # (8, W) packed vectors
        ln1_g, ln1_b = vec[0:1, :D], vec[1:2, :D]
        bqkv = vec[2:3, :3 * D]
        bo = vec[3:4, :D]
        ln2_g, ln2_b = vec[4:5, :D], vec[5:6, :D]
        b1 = vec[6:7, :F_]
        b2 = vec[7:8, :D]

        # --- self-attention sub-block (normalize_before=True) ---
        residual = x
        xn = _layernorm(x, ln1_g, ln1_b)
        qkv = jnp.dot(xn, wqkv, preferred_element_type=jnp.float32) + bqkv  # (N, 3D)

        # per-(batch, head) tiles -> (G, T, hd), G = B*H  (static slices only)
        q_l, k_l, v_l = [], [], []
        for b in range(batch):
            r0 = b * seq
            for h in range(H):
                c = h * hd
                q_l.append(qkv[r0:r0 + seq, 0 * D + c:0 * D + c + hd])
                k_l.append(qkv[r0:r0 + seq, 1 * D + c:1 * D + c + hd])
                v_l.append(qkv[r0:r0 + seq, 2 * D + c:2 * D + c + hd])
        q = jnp.stack(q_l, axis=0) * scale   # (G, T, hd)
        k = jnp.stack(k_l, axis=0)
        v = jnp.stack(v_l, axis=0)

        # all heads & batches in two batched matmuls
        s = jnp.einsum('gte,gse->gts', q, k,
                       preferred_element_type=jnp.float32)        # (G, T, T)
        s = s + kpm                                                # mask keys
        s = s - jnp.max(s, axis=-1, keepdims=True)
        p = jnp.exp(s)
        p = p * pl.reciprocal(jnp.sum(p, axis=-1, keepdims=True), approx=True)
        ctx = jnp.einsum('gts,gse->gte', p, v,
                         preferred_element_type=jnp.float32)       # (G, T, hd)

        # concat heads back to (N, D)
        attn = jnp.concatenate(
            [jnp.concatenate([ctx[b * H + h] for h in range(H)], axis=-1)
             for b in range(batch)], axis=0)
        attn = jnp.dot(attn, wo, preferred_element_type=jnp.float32) + bo
        x = residual + attn                  # dropout1: identity (eval)

        # --- feed-forward sub-block (normalize_before=True) ---
        residual = x
        xn = _layernorm(x, ln2_g, ln2_b)
        h1 = jnp.dot(xn, w1, preferred_element_type=jnp.float32) + b1
        h1 = jnp.maximum(h1, 0.0)            # activation='relu'
        ff = jnp.dot(h1, w2, preferred_element_type=jnp.float32) + b2
        x = residual + ff                    # dropout / dropout2: identity

    if apply_final_norm:
        fn = fnorm_ref[...]                  # (2, D): row0=gamma, row1=beta
        x = _layernorm(x, fn[0:1, :], fn[1:2, :])

    o_ref[...] = x.astype(o_ref.dtype)


# ---- full encoder forward ----------------------------------------------------
@functools.partial(jax.jit, static_argnames=("num_heads", "apply_final_norm"))
def transformer_encoder_forward(x_bct, input_lengths, params, *,
                                num_heads, apply_final_norm=True):
    """x_bct: (B, d_model, T) like the PyTorch module's `input`.
    Returns (padding_mask (B, T) bool, output (B, d_model, T))."""
    B, D, T = x_bct.shape
    x = jnp.transpose(x_bct, (0, 2, 1)).reshape(B * T, D).astype(jnp.float32)

    # get_padding_mask: True at padded positions (t >= length)
    pad_mask = jnp.arange(T)[None, :] >= input_lengths[:, None]       # (B, T)
    kpm = jnp.where(pad_mask, NEG_INF, 0.0).astype(jnp.float32)       # (B, T)
    kpm_g = jnp.repeat(kpm, num_heads, axis=0)[:, None, :]            # (B*H,1,T)

    kern = functools.partial(fused_encoder_kernel,
                             num_heads=num_heads, batch=B, seq=T,
                             apply_final_norm=apply_final_norm)
    out_flat = pl.pallas_call(
        kern,
        out_shape=jax.ShapeDtypeStruct((B * T, D), jnp.float32),
    )(x, kpm_g,
      params['wqkv_t'], params['wo_t'], params['w1_t'], params['w2_t'],
      params['vecs'], params['fnorm'])

    out = jnp.transpose(out_flat.reshape(B, T, D), (0, 2, 1))          # (B, D, T)
    return pad_mask, out


# ---- deterministic parameter init + host-side packing ------------------------
def init_params(key, num_layers, d_model, dim_ff):
    D, F_ = d_model, dim_ff
    vec_w = max(3 * D, F_)

    def pad(v):
        return jnp.pad(v, (0, vec_w - v.shape[0]))

    wqkv_t, wo_t, w1_t, w2_t, vecs = [], [], [], [], []
    for i in range(num_layers):
        k = jax.random.fold_in(key, i)
        ks = jax.random.split(k, 6)
        wqkv = 0.05 * jax.random.normal(ks[0], (3 * D, D), jnp.float32)
        bqkv = 0.02 * jax.random.normal(ks[1], (3 * D,), jnp.float32)
        wo = 0.05 * jax.random.normal(ks[2], (D, D), jnp.float32)
        bo = jnp.zeros((D,), jnp.float32)
        w1 = 0.05 * jax.random.normal(ks[3], (F_, D), jnp.float32)
        b1 = 0.02 * jax.random.normal(ks[4], (F_,), jnp.float32)
        w2 = 0.05 * jax.random.normal(ks[5], (D, F_), jnp.float32)
        b2 = jnp.zeros((D,), jnp.float32)
        ln1_g = jnp.ones((D,), jnp.float32)
        ln1_b = jnp.zeros((D,), jnp.float32)
        ln2_g = jnp.ones((D,), jnp.float32)
        ln2_b = jnp.zeros((D,), jnp.float32)

        # pre-transpose weights (x @ W.T == x @ W_t) so the kernel has no XLU transposes
        wqkv_t.append(wqkv.T)   # (D, 3D)
        wo_t.append(wo.T)       # (D, D)
        w1_t.append(w1.T)       # (D, F)
        w2_t.append(w2.T)       # (F, D)
        # pack the 8 vector params of this layer into one (8, vec_w) slab
        vecs.append(jnp.stack([pad(ln1_g), pad(ln1_b), pad(bqkv), pad(bo),
                               pad(ln2_g), pad(ln2_b), pad(b1), pad(b2)]))

    return {
        'wqkv_t': jnp.stack(wqkv_t),   # (L, D, 3D)
        'wo_t': jnp.stack(wo_t),       # (L, D, D)
        'w1_t': jnp.stack(w1_t),       # (L, D, F)
        'w2_t': jnp.stack(w2_t),       # (L, F, D)
        'vecs': jnp.stack(vecs),       # (L, 8, vec_w)
        'fnorm': jnp.stack([jnp.ones((D,), jnp.float32),
                            jnp.zeros((D,), jnp.float32)]),  # (2, D)
    }


if __name__ == "__main__":
    key = jax.random.PRNGKey(0)
    k_x, k_p = jax.random.split(key)

    # PyTorch-style input: (B, d_model, T)
    x = jax.random.normal(k_x, (BATCH, D_MODEL, SEQ), jnp.float32)
    input_lengths = jnp.array([SEQ, SEQ - 3], jnp.int32)

    params = init_params(k_p, NUM_LAYERS, D_MODEL, DIM_FF)

    pad_mask, out = transformer_encoder_forward(
        x, input_lengths, params, num_heads=NUM_HEADS, apply_final_norm=True)
    out = jax.block_until_ready(out)
    pad_mask = jax.block_until_ready(pad_mask)

    assert out.shape == (BATCH, D_MODEL, SEQ)
    assert pad_mask.shape == (BATCH, SEQ)
    assert bool(jnp.all(jnp.isfinite(out)))
    print("KERNEL_OK")
</pallas_src>

<mosaic_0001>
module attributes {stable_mosaic.version = 11 : i64} {
  func.func @fused_encoder_kernel(%arg0: memref<16x32xf32, #tpu.memory_space<vmem>>, %arg1: memref<8x1x8xf32, #tpu.memory_space<vmem>>, %arg2: memref<2x32x96xf32, #tpu.memory_space<vmem>>, %arg3: memref<2x32x32xf32, #tpu.memory_space<vmem>>, %arg4: memref<2x32x64xf32, #tpu.memory_space<vmem>>, %arg5: memref<2x64x32xf32, #tpu.memory_space<vmem>>, %arg6: memref<2x8x96xf32, #tpu.memory_space<vmem>>, %arg7: memref<2x32xf32, #tpu.memory_space<vmem>>, %arg8: memref<16x32xf32, #tpu.memory_space<vmem>>) attributes {dimension_semantics = [], scalar_prefetch = 0 : i64, scratch_operands = 0 : i64, tpu.core_type = #tpu.core_type<tc>} {
    %c0 = arith.constant 0 : index
    %c0_0 = arith.constant 0 : index
    %0 = vector.load %arg0[%c0, %c0_0] : memref<16x32xf32, #tpu.memory_space<vmem>>, vector<16x32xf32>
    %c0_1 = arith.constant 0 : index
    %c0_2 = arith.constant 0 : index
    %c0_3 = arith.constant 0 : index
    %1 = vector.load %arg1[%c0_1, %c0_2, %c0_3] : memref<8x1x8xf32, #tpu.memory_space<vmem>>, vector<8x1x8xf32>
    %c0_4 = arith.constant 0 : index
    %c0_5 = arith.constant 0 : index
    %c0_6 = arith.constant 0 : index
    %2 = vector.load %arg2[%c0_4, %c0_5, %c0_6] : memref<2x32x96xf32, #tpu.memory_space<vmem>>, vector<1x32x96xf32>
    %3 = vector.shape_cast %2 : vector<1x32x96xf32> to vector<32x96xf32>
    %c0_7 = arith.constant 0 : index
    %c0_8 = arith.constant 0 : index
    %c0_9 = arith.constant 0 : index
    %4 = vector.load %arg3[%c0_7, %c0_8, %c0_9] : memref<2x32x32xf32, #tpu.memory_space<vmem>>, vector<1x32x32xf32>
    %5 = vector.shape_cast %4 : vector<1x32x32xf32> to vector<32x32xf32>
    %c0_10 = arith.constant 0 : index
    %c0_11 = arith.constant 0 : index
    %c0_12 = arith.constant 0 : index
    %6 = vector.load %arg4[%c0_10, %c0_11, %c0_12] : memref<2x32x64xf32, #tpu.memory_space<vmem>>, vector<1x32x64xf32>
    %7 = vector.shape_cast %6 : vector<1x32x64xf32> to vector<32x64xf32>
    %c0_13 = arith.constant 0 : index
    %c0_14 = arith.constant 0 : index
    %c0_15 = arith.constant 0 : index
    %8 = vector.load %arg5[%c0_13, %c0_14, %c0_15] : memref<2x64x32xf32, #tpu.memory_space<vmem>>, vector<1x64x32xf32>
    %9 = vector.shape_cast %8 : vector<1x64x32xf32> to vector<64x32xf32>
    %c0_16 = arith.constant 0 : index
    %c0_17 = arith.constant 0 : index
    %c0_18 = arith.constant 0 : index
    %10 = vector.load %arg6[%c0_16, %c0_17, %c0_18] : memref<2x8x96xf32, #tpu.memory_space<vmem>>, vector<1x8x96xf32>
    %11 = vector.shape_cast %10 : vector<1x8x96xf32> to vector<8x96xf32>
    %12 = vector.extract_strided_slice %11 {offsets = [0, 0], sizes = [1, 32], strides = [1, 1]} : vector<8x96xf32> to vector<1x32xf32>
    %13 = vector.extract_strided_slice %11 {offsets = [1, 0], sizes = [1, 32], strides = [1, 1]} : vector<8x96xf32> to vector<1x32xf32>
    %14 = vector.extract_strided_slice %11 {offsets = [2, 0], sizes = [1, 96], strides = [1, 1]} : vector<8x96xf32> to vector<1x96xf32>
    %15 = vector.extract_strided_slice %11 {offsets = [3, 0], sizes = [1, 32], strides = [1, 1]} : vector<8x96xf32> to vector<1x32xf32>
    %16 = vector.extract_strided_slice %11 {offsets = [4, 0], sizes = [1, 32], strides = [1, 1]} : vector<8x96xf32> to vector<1x32xf32>
    %17 = vector.extract_strided_slice %11 {offsets = [5, 0], sizes = [1, 32], strides = [1, 1]} : vector<8x96xf32> to vector<1x32xf32>
    %18 = vector.extract_strided_slice %11 {offsets = [6, 0], sizes = [1, 64], strides = [1, 1]} : vector<8x96xf32> to vector<1x64xf32>
    %19 = vector.extract_strided_slice %11 {offsets = [7, 0], sizes = [1, 32], strides = [1, 1]} : vector<8x96xf32> to vector<1x32xf32>
    %cst = arith.constant dense<0.000000e+00> : vector<16xf32>
    %20 = vector.multi_reduction <add>, %0, %cst [1] : vector<16x32xf32> to vector<16xf32>
    %21 = vector.shape_cast %20 : vector<16xf32> to vector<16x1xf32>
    %cst_19 = arith.constant 3.200000e+01 : f32
    %22 = vector.broadcast %cst_19 : f32 to vector<16x1xf32>
    %23 = arith.divf %21, %22 : vector<16x1xf32>
    %24 = vector.broadcast %23 : vector<16x1xf32> to vector<16x32xf32>
    %25 = arith.subf %0, %24 : vector<16x32xf32>
    %26 = arith.mulf %25, %25 : vector<16x32xf32>
    %cst_20 = arith.constant dense<0.000000e+00> : vector<16xf32>
    %27 = vector.multi_reduction <add>, %26, %cst_20 [1] : vector<16x32xf32> to vector<16xf32>
    %28 = vector.shape_cast %27 : vector<16xf32> to vector<16x1xf32>
    %cst_21 = arith.constant 3.200000e+01 : f32
    %29 = vector.broadcast %cst_21 : f32 to vector<16x1xf32>
    %30 = arith.divf %28, %29 : vector<16x1xf32>
    %31 = vector.broadcast %23 : vector<16x1xf32> to vector<16x32xf32>
    %32 = arith.subf %0, %31 : vector<16x32xf32>
    %cst_22 = arith.constant 9.99999974E-6 : f32
    %33 = vector.broadcast %cst_22 : f32 to vector<16x1xf32>
    %34 = arith.addf %30, %33 : vector<16x1xf32>
    %35 = math.rsqrt %34 : vector<16x1xf32>
    %36 = vector.broadcast %35 : vector<16x1xf32> to vector<16x32xf32>
    %37 = arith.mulf %32, %36 : vector<16x32xf32>
    %38 = vector.broadcast %12 : vector<1x32xf32> to vector<16x32xf32>
    %39 = arith.mulf %37, %38 : vector<16x32xf32>
    %40 = vector.broadcast %13 : vector<1x32xf32> to vector<16x32xf32>
    %41 = arith.addf %39, %40 : vector<16x32xf32>
    %cst_23 = arith.constant dense<0.000000e+00> : vector<16x96xf32>
    %42 = tpu.matmul %41, %3, %cst_23 {dimension_numbers = #tpu.dot_dimension_numbers<[1], [0], [0], [1], [0, 0, 1, 1], [], []>} : vector<16x32xf32>, vector<32x96xf32>, vector<16x96xf32> -> vector<16x96xf32>
    %43 = vector.broadcast %14 : vector<1x96xf32> to vector<16x96xf32>
    %44 = arith.addf %42, %43 : vector<16x96xf32>
    %45 = vector.extract_strided_slice %44 {offsets = [0, 0], sizes = [8, 8], strides = [1, 1]} : vector<16x96xf32> to vector<8x8xf32>
    %46 = vector.extract_strided_slice %44 {offsets = [0, 32], sizes = [8, 8], strides = [1, 1]} : vector<16x96xf32> to vector<8x8xf32>
    %47 = vector.extract_strided_slice %44 {offsets = [0, 64], sizes = [8, 8], strides = [1, 1]} : vector<16x96xf32> to vector<8x8xf32>
    %48 = vector.extract_strided_slice %44 {offsets = [0, 8], sizes = [8, 8], strides = [1, 1]} : vector<16x96xf32> to vector<8x8xf32>
    %49 = vector.extract_strided_slice %44 {offsets = [0, 40], sizes = [8, 8], strides = [1, 1]} : vector<16x96xf32> to vector<8x8xf32>
    %50 = vector.extract_strided_slice %44 {offsets = [0, 72], sizes = [8, 8], strides = [1, 1]} : vector<16x96xf32> to vector<8x8xf32>
    %51 = vector.extract_strided_slice %44 {offsets = [0, 16], sizes = [8, 8], strides = [1, 1]} : vector<16x96xf32> to vector<8x8xf32>
    %52 = vector.extract_strided_slice %44 {offsets = [0, 48], sizes = [8, 8], strides = [1, 1]} : vector<16x96xf32> to vector<8x8xf32>
    %53 = vector.extract_strided_slice %44 {offsets = [0, 80], sizes = [8, 8], strides = [1, 1]} : vector<16x96xf32> to vector<8x8xf32>
    %54 = vector.extract_strided_slice %44 {offsets = [0, 24], sizes = [8, 8], strides = [1, 1]} : vector<16x96xf32> to vector<8x8xf32>
    %55 = vector.extract_strided_slice %44 {offsets = [0, 56], sizes = [8, 8], strides = [1, 1]} : vector<16x96xf32> to vector<8x8xf32>
    %56 = vector.extract_strided_slice %44 {offsets = [0, 88], sizes = [8, 8], strides = [1, 1]} : vector<16x96xf32> to vector<8x8xf32>
    %57 = vector.extract_strided_slice %44 {offsets = [8, 0], sizes = [8, 8], strides = [1, 1]} : vector<16x96xf32> to vector<8x8xf32>
    %58 = vector.extract_strided_slice %44 {offsets = [8, 32], sizes = [8, 8], strides = [1, 1]} : vector<16x96xf32> to vector<8x8xf32>
    %59 = vector.extract_strided_slice %44 {offsets = [8, 64], sizes = [8, 8], strides = [1, 1]} : vector<16x96xf32> to vector<8x8xf32>
    %60 = vector.extract_strided_slice %44 {offsets = [8, 8], sizes = [8, 8], strides = [1, 1]} : vector<16x96xf32> to vector<8x8xf32>
    %61 = vector.extract_strided_slice %44 {offsets = [8, 40], sizes = [8, 8], strides = [1, 1]} : vector<16x96xf32> to vector<8x8xf32>
    %62 = vector.extract_strided_slice %44 {offsets = [8, 72], sizes = [8, 8], strides = [1, 1]} : vector<16x96xf32> to vector<8x8xf32>
    %63 = vector.extract_strided_slice %44 {offsets = [8, 16], sizes = [8, 8], strides = [1, 1]} : vector<16x96xf32> to vector<8x8xf32>
    %64 = vector.extract_strided_slice %44 {offsets = [8, 48], sizes = [8, 8], strides = [1, 1]} : vector<16x96xf32> to vector<8x8xf32>
    %65 = vector.extract_strided_slice %44 {offsets = [8, 80], sizes = [8, 8], strides = [1, 1]} : vector<16x96xf32> to vector<8x8xf32>
    %66 = vector.extract_strided_slice %44 {offsets = [8, 24], sizes = [8, 8], strides = [1, 1]} : vector<16x96xf32> to vector<8x8xf32>
    %67 = vector.extract_strided_slice %44 {offsets = [8, 56], sizes = [8, 8], strides = [1, 1]} : vector<16x96xf32> to vector<8x8xf32>
    %68 = vector.extract_strided_slice %44 {offsets = [8, 88], sizes = [8, 8], strides = [1, 1]} : vector<16x96xf32> to vector<8x8xf32>
    %69 = vector.shape_cast %45 : vector<8x8xf32> to vector<1x8x8xf32>
    %70 = vector.shape_cast %48 : vector<8x8xf32> to vector<1x8x8xf32>
    %71 = vector.shape_cast %51 : vector<8x8xf32> to vector<1x8x8xf32>
    %72 = vector.shape_cast %54 : vector<8x8xf32> to vector<1x8x8xf32>
    %73 = vector.shape_cast %57 : vector<8x8xf32> to vector<1x8x8xf32>
    %74 = vector.shape_cast %60 : vector<8x8xf32> to vector<1x8x8xf32>
    %75 = vector.shape_cast %63 : vector<8x8xf32> to vector<1x8x8xf32>
    %76 = vector.shape_cast %66 : vector<8x8xf32> to vector<1x8x8xf32>
    %77 = tpu.concatenate %69, %70, %71, %72, %73, %74, %75, %76 in 0 : vector<1x8x8xf32>, vector<1x8x8xf32>, vector<1x8x8xf32>, vector<1x8x8xf32>, vector<1x8x8xf32>, vector<1x8x8xf32>, vector<1x8x8xf32>, vector<1x8x8xf32> -> vector<8x8x8xf32>
    %cst_24 = arith.constant 0.353553385 : f32
    %78 = vector.broadcast %cst_24 : f32 to vector<8x8x8xf32>
    %79 = arith.mulf %77, %78 : vector<8x8x8xf32>
    %80 = vector.shape_cast %46 : vector<8x8xf32> to vector<1x8x8xf32>
    %81 = vector.shape_cast %49 : vector<8x8xf32> to vector<1x8x8xf32>
    %82 = vector.shape_cast %52 : vector<8x8xf32> to vector<1x8x8xf32>
    %83 = vector.shape_cast %55 : vector<8x8xf32> to vector<1x8x8xf32>
    %84 = vector.shape_cast %58 : vector<8x8xf32> to vector<1x8x8xf32>
    %85 = vector.shape_cast %61 : vector<8x8xf32> to vector<1x8x8xf32>
    %86 = vector.shape_cast %64 : vector<8x8xf32> to vector<1x8x8xf32>
    %87 = vector.shape_cast %67 : vector<8x8xf32> to vector<1x8x8xf32>
    %88 = tpu.concatenate %80, %81, %82, %83, %84, %85, %86, %87 in 0 : vector<1x8x8xf32>, vector<1x8x8xf32>, vector<1x8x8xf32>, vector<1x8x8xf32>, vector<1x8x8xf32>, vector<1x8x8xf32>, vector<1x8x8xf32>, vector<1x8x8xf32> -> vector<8x8x8xf32>
    %89 = vector.shape_cast %47 : vector<8x8xf32> to vector<1x8x8xf32>
    %90 = vector.shape_cast %50 : vector<8x8xf32> to vector<1x8x8xf32>
    %91 = vector.shape_cast %53 : vector<8x8xf32> to vector<1x8x8xf32>
    %92 = vector.shape_cast %56 : vector<8x8xf32> to vector<1x8x8xf32>
    %93 = vector.shape_cast %59 : vector<8x8xf32> to vector<1x8x8xf32>
    %94 = vector.shape_cast %62 : vector<8x8xf32> to vector<1x8x8xf32>
    %95 = vector.shape_cast %65 : vector<8x8xf32> to vector<1x8x8xf32>
    %96 = vector.shape_cast %68 : vector<8x8xf32> to vector<1x8x8xf32>
    %97 = tpu.concatenate %89, %90, %91, %92, %93, %94, %95, %96 in 0 : vector<1x8x8xf32>, vector<1x8x8xf32>, vector<1x8x8xf32>, vector<1x8x8xf32>, vector<1x8x8xf32>, vector<1x8x8xf32>, vector<1x8x8xf32>, vector<1x8x8xf32> -> vector<8x8x8xf32>
    "tpu.trace_start"() <{level = 10 : i32, message = "gte,gse->gts"}> : () -> ()
    %cst_25 = arith.constant dense<0.000000e+00> : vector<8x8x8xf32>
    %98 = tpu.matmul %79, %88, %cst_25 {dimension_numbers = #tpu.dot_dimension_numbers<[2], [2], [1], [1], [0, 0, 0, 1, 1, 1], [0], [0]>} : vector<8x8x8xf32>, vector<8x8x8xf32>, vector<8x8x8xf32> -> vector<8x8x8xf32>
    "tpu.trace_stop"() : () -> ()
    %99 = vector.broadcast %1 : vector<8x1x8xf32> to vector<8x8x8xf32>
    %100 = arith.addf %98, %99 : vector<8x8x8xf32>
    %cst_26 = arith.constant dense<0xFF800000> : vector<8x8xf32>
    %101 = vector.multi_reduction <maximumf>, %100, %cst_26 [2] : vector<8x8x8xf32> to vector<8x8xf32>
    %102 = vector.shape_cast %101 : vector<8x8xf32> to vector<8x8x1xf32>
    %103 = vector.broadcast %102 : vector<8x8x1xf32> to vector<8x8x8xf32>
    %104 = arith.subf %100, %103 : vector<8x8x8xf32>
    %105 = math.exp %104 : vector<8x8x8xf32>
    %cst_27 = arith.constant dense<0.000000e+00> : vector<8x8xf32>
    %106 = vector.multi_reduction <add>, %105, %cst_27 [2] : vector<8x8x8xf32> to vector<8x8xf32>
    %107 = vector.shape_cast %106 : vector<8x8xf32> to vector<8x8x1xf32>
    %108 = tpu.reciprocal %107 {approx = true} : vector<8x8x1xf32> -> vector<8x8x1xf32>
    %109 = vector.broadcast %108 : vector<8x8x1xf32> to vector<8x8x8xf32>
    %110 = arith.mulf %105, %109 : vector<8x8x8xf32>
    "tpu.trace_start"() <{level = 10 : i32, message = "gts,gse->gte"}> : () -> ()
    %cst_28 = arith.constant dense<0.000000e+00> : vector<8x8x8xf32>
    %111 = tpu.matmul %110, %97, %cst_28 {dimension_numbers = #tpu.dot_dimension_numbers<[2], [1], [1], [2], [0, 0, 0, 1, 1, 2], [0], [0]>} : vector<8x8x8xf32>, vector<8x8x8xf32>, vector<8x8x8xf32> -> vector<8x8x8xf32>
    "tpu.trace_stop"() : () -> ()
    %112 = vector.extract_strided_slice %111 {offsets = [0, 0, 0], sizes = [1, 8, 8], strides = [1, 1, 1]} : vector<8x8x8xf32> to vector<1x8x8xf32>
    %113 = vector.shape_cast %112 : vector<1x8x8xf32> to vector<8x8xf32>
    %114 = vector.extract_strided_slice %111 {offsets = [1, 0, 0], sizes = [1, 8, 8], strides = [1, 1, 1]} : vector<8x8x8xf32> to vector<1x8x8xf32>
    %115 = vector.shape_cast %114 : vector<1x8x8xf32> to vector<8x8xf32>
    %116 = vector.extract_strided_slice %111 {offsets = [2, 0, 0], sizes = [1, 8, 8], strides = [1, 1, 1]} : vector<8x8x8xf32> to vector<1x8x8xf32>
    %117 = vector.shape_cast %116 : vector<1x8x8xf32> to vector<8x8xf32>
    %118 = vector.extract_strided_slice %111 {offsets = [3, 0, 0], sizes = [1, 8, 8], strides = [1, 1, 1]} : vector<8x8x8xf32> to vector<1x8x8xf32>
    %119 = vector.shape_cast %118 : vector<1x8x8xf32> to vector<8x8xf32>
    %120 = tpu.concatenate %113, %115, %117, %119 in 1 : vector<8x8xf32>, vector<8x8xf32>, vector<8x8xf32>, vector<8x8xf32> -> vector<8x32xf32>
    %121 = vector.extract_strided_slice %111 {offsets = [4, 0, 0], sizes = [1, 8, 8], strides = [1, 1, 1]} : vector<8x8x8xf32> to vector<1x8x8xf32>
    %122 = vector.shape_cast %121 : vector<1x8x8xf32> to vector<8x8xf32>
    %123 = vector.extract_strided_slice %111 {offsets = [5, 0, 0], sizes = [1, 8, 8], strides = [1, 1, 1]} : vector<8x8x8xf32> to vector<1x8x8xf32>
    %124 = vector.shape_cast %123 : vector<1x8x8xf32> to vector<8x8xf32>
    %125 = vector.extract_strided_slice %111 {offsets = [6, 0, 0], sizes = [1, 8, 8], strides = [1, 1, 1]} : vector<8x8x8xf32> to vector<1x8x8xf32>
    %126 = vector.shape_cast %125 : vector<1x8x8xf32> to vector<8x8xf32>
    %127 = vector.extract_strided_slice %111 {offsets = [7, 0, 0], sizes = [1, 8, 8], strides = [1, 1, 1]} : vector<8x8x8xf32> to vector<1x8x8xf32>
    %128 = vector.shape_cast %127 : vector<1x8x8xf32> to vector<8x8xf32>
    %129 = tpu.concatenate %122, %124, %126, %128 in 1 : vector<8x8xf32>, vector<8x8xf32>, vector<8x8xf32>, vector<8x8xf32> -> vector<8x32xf32>
    %130 = tpu.concatenate %120, %129 in 0 : vector<8x32xf32>, vector<8x32xf32> -> vector<16x32xf32>
    %cst_29 = arith.constant dense<0.000000e+00> : vector<16x32xf32>
    %131 = tpu.matmul %130, %5, %cst_29 {dimension_numbers = #tpu.dot_dimension_numbers<[1], [0], [0], [1], [0, 0, 1, 1], [], []>} : vector<16x32xf32>, vector<32x32xf32>, vector<16x32xf32> -> vector<16x32xf32>
    %132 = vector.broadcast %15 : vector<1x32xf32> to vector<16x32xf32>
    %133 = arith.addf %131, %132 : vector<16x32xf32>
    %134 = arith.addf %0, %133 : vector<16x32xf32>
    %cst_30 = arith.constant dense<0.000000e+00> : vector<16xf32>
    %135 = vector.multi_reduction <add>, %134, %cst_30 [1] : vector<16x32xf32> to vector<16xf32>
    %136 = vector.shape_cast %135 : vector<16xf32> to vector<16x1xf32>
    %cst_31 = arith.constant 3.200000e+01 : f32
    %137 = vector.broadcast %cst_31 : f32 to vector<16x1xf32>
    %138 = arith.divf %136, %137 : vector<16x1xf32>
    %139 = vector.broadcast %138 : vector<16x1xf32> to vector<16x32xf32>
    %140 = arith.subf %134, %139 : vector<16x32xf32>
    %141 = arith.mulf %140, %140 : vector<16x32xf32>
    %cst_32 = arith.constant dense<0.000000e+00> : vector<16xf32>
    %142 = vector.multi_reduction <add>, %141, %cst_32 [1] : vector<16x32xf32> to vector<16xf32>
    %143 = vector.shape_cast %142 : vector<16xf32> to vector<16x1xf32>
    %cst_33 = arith.constant 3.200000e+01 : f32
    %144 = vector.broadcast %cst_33 : f32 to vector<16x1xf32>
    %145 = arith.divf %143, %144 : vector<16x1xf32>
    %146 = vector.broadcast %138 : vector<16x1xf32> to vector<16x32xf32>
    %147 = arith.subf %134, %146 : vector<16x32xf32>
    %cst_34 = arith.constant 9.99999974E-6 : f32
    %148 = vector.broadcast %cst_34 : f32 to vector<16x1xf32>
    %149 = arith.addf %145, %148 : vector<16x1xf32>
    %150 = math.rsqrt %149 : vector<16x1xf32>
    %151 = vector.broadcast %150 : vector<16x1xf32> to vector<16x32xf32>
    %152 = arith.mulf %147, %151 : vector<16x32xf32>
    %153 = vector.broadcast %16 : vector<1x32xf32> to vector<16x32xf32>
    %154 = arith.mulf %152, %153 : vector<16x32xf32>
    %155 = vector.broadcast %17 : vector<1x32xf32> to vector<16x32xf32>
    %156 = arith.addf %154, %155 : vector<16x32xf32>
    %cst_35 = arith.constant dense<0.000000e+00> : vector<16x64xf32>
    %157 = tpu.matmul %156, %7, %cst_35 {dimension_numbers = #tpu.dot_dimension_numbers<[1], [0], [0], [1], [0, 0, 1, 1], [], []>} : vector<16x32xf32>, vector<32x64xf32>, vector<16x64xf32> -> vector<16x64xf32>
    %158 = vector.broadcast %18 : vector<1x64xf32> to vector<16x64xf32>
    %159 = arith.addf %157, %158 : vector<16x64xf32>
    %cst_36 = arith.constant 0.000000e+00 : f32
    %160 = vector.broadcast %cst_36 : f32 to vector<16x64xf32>
    %161 = arith.maximumf %159, %160 : vector<16x64xf32>
    %cst_37 = arith.constant dense<0.000000e+00> : vector<16x32xf32>
    %162 = tpu.matmul %161, %9, %cst_37 {dimension_numbers = #tpu.dot_dimension_numbers<[1], [0], [0], [1], [0, 0, 1, 1], [], []>} : vector<16x64xf32>, vector<64x32xf32>, vector<16x32xf32> -> vector<16x32xf32>
    %163 = vector.broadcast %19 : vector<1x32xf32> to vector<16x32xf32>
    %164 = arith.addf %162, %163 : vector<16x32xf32>
    %165 = arith.addf %134, %164 : vector<16x32xf32>
    %c1 = arith.constant 1 : index
    %c0_38 = arith.constant 0 : index
    %c0_39 = arith.constant 0 : index
    %166 = vector.load %arg2[%c1, %c0_38, %c0_39] : memref<2x32x96xf32, #tpu.memory_space<vmem>>, vector<1x32x96xf32>
    %167 = vector.shape_cast %166 : vector<1x32x96xf32> to vector<32x96xf32>
    %c1_40 = arith.constant 1 : index
    %c0_41 = arith.constant 0 : index
    %c0_42 = arith.constant 0 : index
    %168 = vector.load %arg3[%c1_40, %c0_41, %c0_42] : memref<2x32x32xf32, #tpu.memory_space<vmem>>, vector<1x32x32xf32>
    %169 = vector.shape_cast %168 : vector<1x32x32xf32> to vector<32x32xf32>
    %c1_43 = arith.constant 1 : index
    %c0_44 = arith.constant 0 : index
    %c0_45 = arith.constant 0 : index
    %170 = vector.load %arg4[%c1_43, %c0_44, %c0_45] : memref<2x32x64xf32, #tpu.memory_space<vmem>>, vector<1x32x64xf32>
    %171 = vector.shape_cast %170 : vector<1x32x64xf32> to vector<32x64xf32>
    %c1_46 = arith.constant 1 : index
    %c0_47 = arith.constant 0 : index
    %c0_48 = arith.constant 0 : index
    %172 = vector.load %arg5[%c1_46, %c0_47, %c0_48] : memref<2x64x32xf32, #tpu.memory_space<vmem>>, vector<1x64x32xf32>
    %173 = vector.shape_cast %172 : vector<1x64x32xf32> to vector<64x32xf32>
    %c1_49 = arith.constant 1 : index
    %c0_50 = arith.constant 0 : index
    %c0_51 = arith.constant 0 : index
    %174 = vector.load %arg6[%c1_49, %c0_50, %c0_51] : memref<2x8x96xf32, #tpu.memory_space<vmem>>, vector<1x8x96xf32>
    %175 = vector.shape_cast %174 : vector<1x8x96xf32> to vector<8x96xf32>
    %176 = vector.extract_strided_slice %175 {offsets = [0, 0], sizes = [1, 32], strides = [1, 1]} : vector<8x96xf32> to vector<1x32xf32>
    %177 = vector.extract_strided_slice %175 {offsets = [1, 0], sizes = [1, 32], strides = [1, 1]} : vector<8x96xf32> to vector<1x32xf32>
    %178 = vector.extract_strided_slice %175 {offsets = [2, 0], sizes = [1, 96], strides = [1, 1]} : vector<8x96xf32> to vector<1x96xf32>
    %179 = vector.extract_strided_slice %175 {offsets = [3, 0], sizes = [1, 32], strides = [1, 1]} : vector<8x96xf32> to vector<1x32xf32>
    %180 = vector.extract_strided_slice %175 {offsets = [4, 0], sizes = [1, 32], strides = [1, 1]} : vector<8x96xf32> to vector<1x32xf32>
    %181 = vector.extract_strided_slice %175 {offsets = [5, 0], sizes = [1, 32], strides = [1, 1]} : vector<8x96xf32> to vector<1x32xf32>
    %182 = vector.extract_strided_slice %175 {offsets = [6, 0], sizes = [1, 64], strides = [1, 1]} : vector<8x96xf32> to vector<1x64xf32>
    %183 = vector.extract_strided_slice %175 {offsets = [7, 0], sizes = [1, 32], strides = [1, 1]} : vector<8x96xf32> to vector<1x32xf32>
    %cst_52 = arith.constant dense<0.000000e+00> : vector<16xf32>
    %184 = vector.multi_reduction <add>, %165, %cst_52 [1] : vector<16x32xf32> to vector<16xf32>
    %185 = vector.shape_cast %184 : vector<16xf32> to vector<16x1xf32>
    %cst_53 = arith.constant 3.200000e+01 : f32
    %186 = vector.broadcast %cst_53 : f32 to vector<16x1xf32>
    %187 = arith.divf %185, %186 : vector<16x1xf32>
    %188 = vector.broadcast %187 : vector<16x1xf32> to vector<16x32xf32>
    %189 = arith.subf %165, %188 : vector<16x32xf32>
    %190 = arith.mulf %189, %189 : vector<16x32xf32>
    %cst_54 = arith.constant dense<0.000000e+00> : vector<16xf32>
    %191 = vector.multi_reduction <add>, %190, %cst_54 [1] : vector<16x32xf32> to vector<16xf32>
    %192 = vector.shape_cast %191 : vector<16xf32> to vector<16x1xf32>
    %cst_55 = arith.constant 3.200000e+01 : f32
    %193 = vector.broadcast %cst_55 : f32 to vector<16x1xf32>
    %194 = arith.divf %192, %193 : vector<16x1xf32>
    %195 = vector.broadcast %187 : vector<16x1xf32> to vector<16x32xf32>
    %196 = arith.subf %165, %195 : vector<16x32xf32>
    %cst_56 = arith.constant 9.99999974E-6 : f32
    %197 = vector.broadcast %cst_56 : f32 to vector<16x1xf32>
    %198 = arith.addf %194, %197 : vector<16x1xf32>
    %199 = math.rsqrt %198 : vector<16x1xf32>
    %200 = vector.broadcast %199 : vector<16x1xf32> to vector<16x32xf32>
    %201 = arith.mulf %196, %200 : vector<16x32xf32>
    %202 = vector.broadcast %176 : vector<1x32xf32> to vector<16x32xf32>
    %203 = arith.mulf %201, %202 : vector<16x32xf32>
    %204 = vector.broadcast %177 : vector<1x32xf32> to vector<16x32xf32>
    %205 = arith.addf %203, %204 : vector<16x32xf32>
    %cst_57 = arith.constant dense<0.000000e+00> : vector<16x96xf32>
    %206 = tpu.matmul %205, %167, %cst_57 {dimension_numbers = #tpu.dot_dimension_numbers<[1], [0], [0], [1], [0, 0, 1, 1], [], []>} : vector<16x32xf32>, vector<32x96xf32>, vector<16x96xf32> -> vector<16x96xf32>
    %207 = vector.broadcast %178 : vector<1x96xf32> to vector<16x96xf32>
    %208 = arith.addf %206, %207 : vector<16x96xf32>
    %209 = vector.extract_strided_slice %208 {offsets = [0, 0], sizes = [8, 8], strides = [1, 1]} : vector<16x96xf32> to vector<8x8xf32>
    %210 = vector.extract_strided_slice %208 {offsets = [0, 32], sizes = [8, 8], strides = [1, 1]} : vector<16x96xf32> to vector<8x8xf32>
    %211 = vector.extract_strided_slice %208 {offsets = [0, 64], sizes = [8, 8], strides = [1, 1]} : vector<16x96xf32> to vector<8x8xf32>
    %212 = vector.extract_strided_slice %208 {offsets = [0, 8], sizes = [8, 8], strides = [1, 1]} : vector<16x96xf32> to vector<8x8xf32>
    %213 = vector.extract_strided_slice %208 {offsets = [0, 40], sizes = [8, 8], strides = [1, 1]} : vector<16x96xf32> to vector<8x8xf32>
    %214 = vector.extract_strided_slice %208 {offsets = [0, 72], sizes = [8, 8], strides = [1, 1]} : vector<16x96xf32> to vector<8x8xf32>
    %215 = vector.extract_strided_slice %208 {offsets = [0, 16], sizes = [8, 8], strides = [1, 1]} : vector<16x96xf32> to vector<8x8xf32>
    %216 = vector.extract_strided_slice %208 {offsets = [0, 48], sizes = [8, 8], strides = [1, 1]} : vector<16x96xf32> to vector<8x8xf32>
    %217 = vector.extract_strided_slice %208 {offsets = [0, 80], sizes = [8, 8], strides = [1, 1]} : vector<16x96xf32> to vector<8x8xf32>
    %218 = vector.extract_strided_slice %208 {offsets = [0, 24], sizes = [8, 8], strides = [1, 1]} : vector<16x96xf32> to vector<8x8xf32>
    %219 = vector.extract_strided_slice %208 {offsets = [0, 56], sizes = [8, 8], strides = [1, 1]} : vector<16x96xf32> to vector<8x8xf32>
    %220 = vector.extract_strided_slice %208 {offsets = [0, 88], sizes = [8, 8], strides = [1, 1]} : vector<16x96xf32> to vector<8x8xf32>
    %221 = vector.extract_strided_slice %208 {offsets = [8, 0], sizes = [8, 8], strides = [1, 1]} : vector<16x96xf32> to vector<8x8xf32>
    %222 = vector.extract_strided_slice %208 {offsets = [8, 32], sizes = [8, 8], strides = [1, 1]} : vector<16x96xf32> to vector<8x8xf32>
    %223 = vector.extract_strided_slice %208 {offsets = [8, 64], sizes = [8, 8], strides = [1, 1]} : vector<16x96xf32> to vector<8x8xf32>
    %224 = vector.extract_strided_slice %208 {offsets = [8, 8], sizes = [8, 8], strides = [1, 1]} : vector<16x96xf32> to vector<8x8xf32>
    %225 = vector.extract_strided_slice %208 {offsets = [8, 40], sizes = [8, 8], strides = [1, 1]} : vector<16x96xf32> to vector<8x8xf32>
    %226 = vector.extract_strided_slice %208 {offsets = [8, 72], sizes = [8, 8], strides = [1, 1]} : vector<16x96xf32> to vector<8x8xf32>
    %227 = vector.extract_strided_slice %208 {offsets = [8, 16], sizes = [8, 8], strides = [1, 1]} : vector<16x96xf32> to vector<8x8xf32>
    %228 = vector.extract_strided_slice %208 {offsets = [8, 48], sizes = [8, 8], strides = [1, 1]} : vector<16x96xf32> to vector<8x8xf32>
    %229 = vector.extract_strided_slice %208 {offsets = [8, 80], sizes = [8, 8], strides = [1, 1]} : vector<16x96xf32> to vector<8x8xf32>
    %230 = vector.extract_strided_slice %208 {offsets = [8, 24], sizes = [8, 8], strides = [1, 1]} : vector<16x96xf32> to vector<8x8xf32>
    %231 = vector.extract_strided_slice %208 {offsets = [8, 56], sizes = [8, 8], strides = [1, 1]} : vector<16x96xf32> to vector<8x8xf32>
    %232 = vector.extract_strided_slice %208 {offsets = [8, 88], sizes = [8, 8], strides = [1, 1]} : vector<16x96xf32> to vector<8x8xf32>
    %233 = vector.shape_cast %209 : vector<8x8xf32> to vector<1x8x8xf32>
    %234 = vector.shape_cast %212 : vector<8x8xf32> to vector<1x8x8xf32>
    %235 = vector.shape_cast %215 : vector<8x8xf32> to vector<1x8x8xf32>
    %236 = vector.shape_cast %218 : vector<8x8xf32> to vector<1x8x8xf32>
    %237 = vector.shape_cast %221 : vector<8x8xf32> to vector<1x8x8xf32>
    %238 = vector.shape_cast %224 : vector<8x8xf32> to vector<1x8x8xf32>
    %239 = vector.shape_cast %227 : vector<8x8xf32> to vector<1x8x8xf32>
    %240 = vector.shape_cast %230 : vector<8x8xf32> to vector<1x8x8xf32>
    %241 = tpu.concatenate %233, %234, %235, %236, %237, %238, %239, %240 in 0 : vector<1x8x8xf32>, vector<1x8x8xf32>, vector<1x8x8xf32>, vector<1x8x8xf32>, vector<1x8x8xf32>, vector<1x8x8xf32>, vector<1x8x8xf32>, vector<1x8x8xf32> -> vector<8x8x8xf32>
    %cst_58 = arith.constant 0.353553385 : f32
    %242 = vector.broadcast %cst_58 : f32 to vector<8x8x8xf32>
    %243 = arith.mulf %241, %242 : vector<8x8x8xf32>
    %244 = vector.shape_cast %210 : vector<8x8xf32> to vector<1x8x8xf32>
    %245 = vector.shape_cast %213 : vector<8x8xf32> to vector<1x8x8xf32>
    %246 = vector.shape_cast %216 : vector<8x8xf32> to vector<1x8x8xf32>
    %247 = vector.shape_cast %219 : vector<8x8xf32> to vector<1x8x8xf32>
    %248 = vector.shape_cast %222 : vector<8x8xf32> to vector<1x8x8xf32>
    %249 = vector.shape_cast %225 : vector<8x8xf32> to vector<1x8x8xf32>
    %250 = vector.shape_cast %228 : vector<8x8xf32> to vector<1x8x8xf32>
    %251 = vector.shape_cast %231 : vector<8x8xf32> to vector<1x8x8xf32>
    %252 = tpu.concatenate %244, %245, %246, %247, %248, %249, %250, %251 in 0 : vector<1x8x8xf32>, vector<1x8x8xf32>, vector<1x8x8xf32>, vector<1x8x8xf32>, vector<1x8x8xf32>, vector<1x8x8xf32>, vector<1x8x8xf32>, vector<1x8x8xf32> -> vector<8x8x8xf32>
    %253 = vector.shape_cast %211 : vector<8x8xf32> to vector<1x8x8xf32>
    %254 = vector.shape_cast %214 : vector<8x8xf32> to vector<1x8x8xf32>
    %255 = vector.shape_cast %217 : vector<8x8xf32> to vector<1x8x8xf32>
    %256 = vector.shape_cast %220 : vector<8x8xf32> to vector<1x8x8xf32>
    %257 = vector.shape_cast %223 : vector<8x8xf32> to vector<1x8x8xf32>
    %258 = vector.shape_cast %226 : vector<8x8xf32> to vector<1x8x8xf32>
    %259 = vector.shape_cast %229 : vector<8x8xf32> to vector<1x8x8xf32>
    %260 = vector.shape_cast %232 : vector<8x8xf32> to vector<1x8x8xf32>
    %261 = tpu.concatenate %253, %254, %255, %256, %257, %258, %259, %260 in 0 : vector<1x8x8xf32>, vector<1x8x8xf32>, vector<1x8x8xf32>, vector<1x8x8xf32>, vector<1x8x8xf32>, vector<1x8x8xf32>, vector<1x8x8xf32>, vector<1x8x8xf32> -> vector<8x8x8xf32>
    "tpu.trace_start"() <{level = 10 : i32, message = "gte,gse->gts"}> : () -> ()
    %cst_59 = arith.constant dense<0.000000e+00> : vector<8x8x8xf32>
    %262 = tpu.matmul %243, %252, %cst_59 {dimension_numbers = #tpu.dot_dimension_numbers<[2], [2], [1], [1], [0, 0, 0, 1, 1, 1], [0], [0]>} : vector<8x8x8xf32>, vector<8x8x8xf32>, vector<8x8x8xf32> -> vector<8x8x8xf32>
    "tpu.trace_stop"() : () -> ()
    %263 = vector.broadcast %1 : vector<8x1x8xf32> to vector<8x8x8xf32>
    %264 = arith.addf %262, %263 : vector<8x8x8xf32>
    %cst_60 = arith.constant dense<0xFF800000> : vector<8x8xf32>
    %265 = vector.multi_reduction <maximumf>, %264, %cst_60 [2] : vector<8x8x8xf32> to vector<8x8xf32>
    %266 = vector.shape_cast %265 : vector<8x8xf32> to vector<8x8x1xf32>
    %267 = vector.broadcast %266 : vector<8x8x1xf32> to vector<8x8x8xf32>
    %268 = arith.subf %264, %267 : vector<8x8x8xf32>
    %269 = math.exp %268 : vector<8x8x8xf32>
    %cst_61 = arith.constant dense<0.000000e+00> : vector<8x8xf32>
    %270 = vector.multi_reduction <add>, %269, %cst_61 [2] : vector<8x8x8xf32> to vector<8x8xf32>
    %271 = vector.shape_cast %270 : vector<8x8xf32> to vector<8x8x1xf32>
    %272 = tpu.reciprocal %271 {approx = true} : vector<8x8x1xf32> -> vector<8x8x1xf32>
    %273 = vector.broadcast %272 : vector<8x8x1xf32> to vector<8x8x8xf32>
    %274 = arith.mulf %269, %273 : vector<8x8x8xf32>
    "tpu.trace_start"() <{level = 10 : i32, message = "gts,gse->gte"}> : () -> ()
    %cst_62 = arith.constant dense<0.000000e+00> : vector<8x8x8xf32>
    %275 = tpu.matmul %274, %261, %cst_62 {dimension_numbers = #tpu.dot_dimension_numbers<[2], [1], [1], [2], [0, 0, 0, 1, 1, 2], [0], [0]>} : vector<8x8x8xf32>, vector<8x8x8xf32>, vector<8x8x8xf32> -> vector<8x8x8xf32>
    "tpu.trace_stop"() : () -> ()
    %276 = vector.extract_strided_slice %275 {offsets = [0, 0, 0], sizes = [1, 8, 8], strides = [1, 1, 1]} : vector<8x8x8xf32> to vector<1x8x8xf32>
    %277 = vector.shape_cast %276 : vector<1x8x8xf32> to vector<8x8xf32>
    %278 = vector.extract_strided_slice %275 {offsets = [1, 0, 0], sizes = [1, 8, 8], strides = [1, 1, 1]} : vector<8x8x8xf32> to vector<1x8x8xf32>
    %279 = vector.shape_cast %278 : vector<1x8x8xf32> to vector<8x8xf32>
    %280 = vector.extract_strided_slice %275 {offsets = [2, 0, 0], sizes = [1, 8, 8], strides = [1, 1, 1]} : vector<8x8x8xf32> to vector<1x8x8xf32>
    %281 = vector.shape_cast %280 : vector<1x8x8xf32> to vector<8x8xf32>
    %282 = vector.extract_strided_slice %275 {offsets = [3, 0, 0], sizes = [1, 8, 8], strides = [1, 1, 1]} : vector<8x8x8xf32> to vector<1x8x8xf32>
    %283 = vector.shape_cast %282 : vector<1x8x8xf32> to vector<8x8xf32>
    %284 = tpu.concatenate %277, %279, %281, %283 in 1 : vector<8x8xf32>, vector<8x8xf32>, vector<8x8xf32>, vector<8x8xf32> -> vector<8x32xf32>
    %285 = vector.extract_strided_slice %275 {offsets = [4, 0, 0], sizes = [1, 8, 8], strides = [1, 1, 1]} : vector<8x8x8xf32> to vector<1x8x8xf32>
    %286 = vector.shape_cast %285 : vector<1x8x8xf32> to vector<8x8xf32>
    %287 = vector.extract_strided_slice %275 {offsets = [5, 0, 0], sizes = [1, 8, 8], strides = [1, 1, 1]} : vector<8x8x8xf32> to vector<1x8x8xf32>
    %288 = vector.shape_cast %287 : vector<1x8x8xf32> to vector<8x8xf32>
    %289 = vector.extract_strided_slice %275 {offsets = [6, 0, 0], sizes = [1, 8, 8], strides = [1, 1, 1]} : vector<8x8x8xf32> to vector<1x8x8xf32>
    %290 = vector.shape_cast %289 : vector<1x8x8xf32> to vector<8x8xf32>
    %291 = vector.extract_strided_slice %275 {offsets = [7, 0, 0], sizes = [1, 8, 8], strides = [1, 1, 1]} : vector<8x8x8xf32> to vector<1x8x8xf32>
    %292 = vector.shape_cast %291 : vector<1x8x8xf32> to vector<8x8xf32>
    %293 = tpu.concatenate %286, %288, %290, %292 in 1 : vector<8x8xf32>, vector<8x8xf32>, vector<8x8xf32>, vector<8x8xf32> -> vector<8x32xf32>
    %294 = tpu.concatenate %284, %293 in 0 : vector<8x32xf32>, vector<8x32xf32> -> vector<16x32xf32>
    %cst_63 = arith.constant dense<0.000000e+00> : vector<16x32xf32>
    %295 = tpu.matmul %294, %169, %cst_63 {dimension_numbers = #tpu.dot_dimension_numbers<[1], [0], [0], [1], [0, 0, 1, 1], [], []>} : vector<16x32xf32>, vector<32x32xf32>, vector<16x32xf32> -> vector<16x32xf32>
    %296 = vector.broadcast %179 : vector<1x32xf32> to vector<16x32xf32>
    %297 = arith.addf %295, %296 : vector<16x32xf32>
    %298 = arith.addf %165, %297 : vector<16x32xf32>
    %cst_64 = arith.constant dense<0.000000e+00> : vector<16xf32>
    %299 = vector.multi_reduction <add>, %298, %cst_64 [1] : vector<16x32xf32> to vector<16xf32>
    %300 = vector.shape_cast %299 : vector<16xf32> to vector<16x1xf32>
    %cst_65 = arith.constant 3.200000e+01 : f32
    %301 = vector.broadcast %cst_65 : f32 to vector<16x1xf32>
    %302 = arith.divf %300, %301 : vector<16x1xf32>
    %303 = vector.broadcast %302 : vector<16x1xf32> to vector<16x32xf32>
    %304 = arith.subf %298, %303 : vector<16x32xf32>
    %305 = arith.mulf %304, %304 : vector<16x32xf32>
    %cst_66 = arith.constant dense<0.000000e+00> : vector<16xf32>
    %306 = vector.multi_reduction <add>, %305, %cst_66 [1] : vector<16x32xf32> to vector<16xf32>
    %307 = vector.shape_cast %306 : vector<16xf32> to vector<16x1xf32>
    %cst_67 = arith.constant 3.200000e+01 : f32
    %308 = vector.broadcast %cst_67 : f32 to vector<16x1xf32>
    %309 = arith.divf %307, %308 : vector<16x1xf32>
    %310 = vector.broadcast %302 : vector<16x1xf32> to vector<16x32xf32>
    %311 = arith.subf %298, %310 : vector<16x32xf32>
    %cst_68 = arith.constant 9.99999974E-6 : f32
    %312 = vector.broadcast %cst_68 : f32 to vector<16x1xf32>
    %313 = arith.addf %309, %312 : vector<16x1xf32>
    %314 = math.rsqrt %313 : vector<16x1xf32>
    %315 = vector.broadcast %314 : vector<16x1xf32> to vector<16x32xf32>
    %316 = arith.mulf %311, %315 : vector<16x32xf32>
    %317 = vector.broadcast %180 : vector<1x32xf32> to vector<16x32xf32>
    %318 = arith.mulf %316, %317 : vector<16x32xf32>
    %319 = vector.broadcast %181 : vector<1x32xf32> to vector<16x32xf32>
    %320 = arith.addf %318, %319 : vector<16x32xf32>
    %cst_69 = arith.constant dense<0.000000e+00> : vector<16x64xf32>
    %321 = tpu.matmul %320, %171, %cst_69 {dimension_numbers = #tpu.dot_dimension_numbers<[1], [0], [0], [1], [0, 0, 1, 1], [], []>} : vector<16x32xf32>, vector<32x64xf32>, vector<16x64xf32> -> vector<16x64xf32>
    %322 = vector.broadcast %182 : vector<1x64xf32> to vector<16x64xf32>
    %323 = arith.addf %321, %322 : vector<16x64xf32>
    %cst_70 = arith.constant 0.000000e+00 : f32
    %324 = vector.broadcast %cst_70 : f32 to vector<16x64xf32>
    %325 = arith.maximumf %323, %324 : vector<16x64xf32>
    %cst_71 = arith.constant dense<0.000000e+00> : vector<16x32xf32>
    %326 = tpu.matmul %325, %173, %cst_71 {dimension_numbers = #tpu.dot_dimension_numbers<[1], [0], [0], [1], [0, 0, 1, 1], [], []>} : vector<16x64xf32>, vector<64x32xf32>, vector<16x32xf32> -> vector<16x32xf32>
    %327 = vector.broadcast %183 : vector<1x32xf32> to vector<16x32xf32>
    %328 = arith.addf %326, %327 : vector<16x32xf32>
    %329 = arith.addf %298, %328 : vector<16x32xf32>
    %c0_72 = arith.constant 0 : index
    %c0_73 = arith.constant 0 : index
    %330 = vector.load %arg7[%c0_72, %c0_73] : memref<2x32xf32, #tpu.memory_space<vmem>>, vector<2x32xf32>
    %331 = vector.extract_strided_slice %330 {offsets = [0, 0], sizes = [1, 32], strides = [1, 1]} : vector<2x32xf32> to vector<1x32xf32>
    %332 = vector.extract_strided_slice %330 {offsets = [1, 0], sizes = [1, 32], strides = [1, 1]} : vector<2x32xf32> to vector<1x32xf32>
    %cst_74 = arith.constant dense<0.000000e+00> : vector<16xf32>
    %333 = vector.multi_reduction <add>, %329, %cst_74 [1] : vector<16x32xf32> to vector<16xf32>
    %334 = vector.shape_cast %333 : vector<16xf32> to vector<16x1xf32>
    %cst_75 = arith.constant 3.200000e+01 : f32
    %335 = vector.broadcast %cst_75 : f32 to vector<16x1xf32>
    %336 = arith.divf %334, %335 : vector<16x1xf32>
    %337 = vector.broadcast %336 : vector<16x1xf32> to vector<16x32xf32>
    %338 = arith.subf %329, %337 : vector<16x32xf32>
    %339 = arith.mulf %338, %338 : vector<16x32xf32>
    %cst_76 = arith.constant dense<0.000000e+00> : vector<16xf32>
    %340 = vector.multi_reduction <add>, %339, %cst_76 [1] : vector<16x32xf32> to vector<16xf32>
    %341 = vector.shape_cast %340 : vector<16xf32> to vector<16x1xf32>
    %cst_77 = arith.constant 3.200000e+01 : f32
    %342 = vector.broadcast %cst_77 : f32 to vector<16x1xf32>
    %343 = arith.divf %341, %342 : vector<16x1xf32>
    %344 = vector.broadcast %336 : vector<16x1xf32> to vector<16x32xf32>
    %345 = arith.subf %329, %344 : vector<16x32xf32>
    %cst_78 = arith.constant 9.99999974E-6 : f32
    %346 = vector.broadcast %cst_78 : f32 to vector<16x1xf32>
    %347 = arith.addf %343, %346 : vector<16x1xf32>
    %348 = math.rsqrt %347 : vector<16x1xf32>
    %349 = vector.broadcast %348 : vector<16x1xf32> to vector<16x32xf32>
    %350 = arith.mulf %345, %349 : vector<16x32xf32>
    %351 = vector.broadcast %331 : vector<1x32xf32> to vector<16x32xf32>
    %352 = arith.mulf %350, %351 : vector<16x32xf32>
    %353 = vector.broadcast %332 : vector<1x32xf32> to vector<16x32xf32>
    %354 = arith.addf %352, %353 : vector<16x32xf32>
    %c0_79 = arith.constant 0 : index
    %c0_80 = arith.constant 0 : index
    %355 = vector.load %arg8[%c0_79, %c0_80] : memref<16x32xf32, #tpu.memory_space<vmem>>, vector<16x32xf32>
    tpu.vector_store %arg8[%c0_79, %c0_80], %354 {strides = array<i32>} : memref<16x32xf32, #tpu.memory_space<vmem>>, vector<16x32xf32>,
    return
  }
}

</mosaic_0001>

<llo_original>
// kernel: transformer_encoder_forward.1
$region0: #{transformer_encoder_forward.1}
  #allocation0 [shape = 'u32[]', space=smem, size = 0x4, offset = 0x4, fixed_abs, tag = 'smem constant byte address 0x4 - core index']
  #allocation1 [shape = 'u32[72,128]{1,0:T(1,128)}', space=vmem, size = 0x9000, scoped, tag = 'internal scratch']
  %s0 = inlined_call_operand.vmem [shape: f32[16,32], index: 0, kind: input, shape index: {}]
  %s1 = inlined_call_operand.vmem [shape: f32[8,1,8], index: 1, kind: input, shape index: {}]
  %s2 = inlined_call_operand.vmem [shape: f32[2,32,96], index: 2, kind: input, shape index: {}]
  %s3 = inlined_call_operand.vmem [shape: f32[2,32,32], index: 3, kind: input, shape index: {}]
  %s4 = inlined_call_operand.vmem [shape: f32[2,32,64], index: 4, kind: input, shape index: {}]
  %s5 = inlined_call_operand.vmem [shape: f32[2,64,32], index: 5, kind: input, shape index: {}]
  %s6 = inlined_call_operand.hbm [shape: f32[2,8,96], index: 6, kind: input, shape index: {}]
  %s7 = inlined_call_operand.hbm [shape: f32[2,32], index: 7, kind: input, shape index: {}]
  %s8 = inlined_call_operand.hbm [shape: f32[16,32], index: 8, kind: output, shape index: {}]
  %s9 = sld [smem:[#allocation0]]
  $region50: #{transformer_encoder_forward.1} parent=0
    _
  %s11 = ssub.s32 1, %s9
  %s12 = scalar_select 0, %s11, %s9
  $region1: #{transformer_encoder_forward.1} parent=0
    #allocation2 [shape = 'u8[8192]{0}', space=vmem, size = 0x2000, scoped, tag = 'input window, operand 6, single buffered']
    #allocation3 [shape = 's32[1]{0}', space=sflag, size = 0x4, scoped, tag = 'scoped memory for transformer_encoder_forward.1']
    #allocation4 [shape = 's32[1]{0}', space=sflag, size = 0x4, scoped, tag = 'scoped memory for transformer_encoder_forward.1']
    #allocation5 [shape = 'u8[1024]{0}', space=vmem, size = 0x400, scoped, tag = 'input window, operand 7, single buffered']
    #allocation6 [shape = 's32[1]{0}', space=sflag, size = 0x4, scoped, tag = 'scoped memory for transformer_encoder_forward.1']
    #allocation7 [shape = 'u8[8192]{0}', space=vmem, size = 0x2000, scoped, tag = 'output window, operand 0, single buffered']
    %13 = vsyncpa [#allocation3], 0
    %14 = vsyncpa [#allocation6], 0
    %15 = vsyncpa [#allocation4], 0
    // Predicated region
    $region2: #{transformer_encoder_forward.1} parent=1 // pred_check
      _
    $region3: #{transformer_encoder_forward.1} parent=1 // pred_check_branch
      %17 = sbr.rel (0) target = $region5
    $region4: #{transformer_encoder_forward.1} parent=1 // pred_region
      _
    $region5: #{transformer_encoder_forward.1} parent=1 // pred_fallthru
      _
    // Predicated region
    $region6: #{transformer_encoder_forward.1} parent=1 // pred_check
      _
    $region7: #{transformer_encoder_forward.1} parent=1 // pred_check_branch
      %19 = sbr.rel (0) target = $region9
    $region8: #{transformer_encoder_forward.1} parent=1 // pred_region
      _
    $region9: #{transformer_encoder_forward.1} parent=1 // pred_fallthru
      _
    // Predicated region
    $region10: #{transformer_encoder_forward.1} parent=1 // pred_check
      _
    $region11: #{transformer_encoder_forward.1} parent=1 // pred_check_branch
      %21 = sbr.rel (0) target = $region13
    $region12: #{transformer_encoder_forward.1} parent=1 // pred_region
      _
    $region13: #{transformer_encoder_forward.1} parent=1 // pred_fallthru
      _
    // Predicated region
    $region14: #{transformer_encoder_forward.1} parent=1 // pred_check
      _
    $region15: #{transformer_encoder_forward.1} parent=1 // pred_check_branch
      %23 = sbr.rel (0) target = $region17
    $region16: #{transformer_encoder_forward.1} parent=1 // pred_region
      _
    $region17: #{transformer_encoder_forward.1} parent=1 // pred_fallthru
      _
    // Predicated region
    $region18: #{transformer_encoder_forward.1} parent=1 // pred_check
      _
    $region19: #{transformer_encoder_forward.1} parent=1 // pred_check_branch
      %25 = sbr.rel (0) target = $region21
    $region20: #{transformer_encoder_forward.1} parent=1 // pred_region
      _
    $region21: #{transformer_encoder_forward.1} parent=1 // pred_fallthru
      _
    // Predicated region
    $region22: #{transformer_encoder_forward.1} parent=1 // pred_check
      _
    $region23: #{transformer_encoder_forward.1} parent=1 // pred_check_branch
      %27 = sbr.rel (0) target = $region25
    $region24: #{transformer_encoder_forward.1} parent=1 // pred_region
      _
    $region25: #{transformer_encoder_forward.1} parent=1 // pred_fallthru
      _
    // Predicated region
    $region26: #{transformer_encoder_forward.1} parent=1 // pred_check
      _
    $region27: #{transformer_encoder_forward.1} parent=1 // pred_check_branch
      %29 = sbr.rel (0) target = $region29
    $region28: #{transformer_encoder_forward.1} parent=1 // pred_region
      %31 = vsyncadd [#allocation3], 0
      %s32 = sshll.u32 %s6, 4
      %s33 = int_to_ptr.hbm [resolvable:$true] %s32
      %s34 = sshll.u32 [#allocation2], 4
      %s35 = int_to_ptr.vmem [resolvable:$true] %s34
      %40 = dma.hbm_to_vmem [thread:$0]  %s33, 256, %s35, [#allocation3], 128, 128, 8
    $region29: #{transformer_encoder_forward.1} parent=1 // pred_fallthru
      _
    // Predicated region
    $region30: #{transformer_encoder_forward.1} parent=1 // pred_check
      _
    $region31: #{transformer_encoder_forward.1} parent=1 // pred_check_branch
      %42 = sbr.rel (0) target = $region33
    $region32: #{transformer_encoder_forward.1} parent=1 // pred_region
      %44 = vsyncadd [#allocation6], 0
      %s46 = sshll.u32 %s7, 4
      %s47 = int_to_ptr.hbm [resolvable:$true] %s46
      %s48 = sshll.u32 [#allocation5], 4
      %s49 = int_to_ptr.vmem [resolvable:$true] %s48
      %51 = dma.hbm_to_vmem [thread:$0]  %s47, 32, %s49, [#allocation6]
    $region33: #{transformer_encoder_forward.1} parent=1 // pred_fallthru
      _
    // Predicated region
    $region34: #{transformer_encoder_forward.1} parent=1 // pred_check
      _
    $region35: #{transformer_encoder_forward.1} parent=1 // pred_check_branch
      %53 = sbr.rel (0) target = $region37
    $region36: #{transformer_encoder_forward.1} parent=1 // pred_region
      %55 = dma.done [#allocation3], 256
    $region37: #{transformer_encoder_forward.1} parent=1 // pred_fallthru
      _
    // Predicated region
    $region38: #{transformer_encoder_forward.1} parent=1 // pred_check
      _
    $region39: #{transformer_encoder_forward.1} parent=1 // pred_check_branch
      %57 = sbr.rel (0) target = $region41
    $region40: #{transformer_encoder_forward.1} parent=1 // pred_region
      %59 = dma.done [#allocation6], 32
    $region41: #{transformer_encoder_forward.1} parent=1 // pred_fallthru
      _
    %v60 = vld [vmem:[%s0] sm:$0xff]
    %v61 = vld [vmem:[%s0 + $0x8] sm:$0xff]
    %v62 = vld [vmem:[%s1] sm:$0x1]
    %v63 = vld [vmem:[%s1 + $0x1] sm:$0x1]
    %v64 = vld [vmem:[%s1 + $0x2] sm:$0x1]
    %v65 = vld [vmem:[%s1 + $0x3] sm:$0x1]
    %v66 = vld [vmem:[%s1 + $0x4] sm:$0x1]
    %v67 = vld [vmem:[%s1 + $0x5] sm:$0x1]
    %v68 = vld [vmem:[%s1 + $0x6] sm:$0x1]
    %v69 = vld [vmem:[%s1 + $0x7] sm:$0x1]
    %v70 = vld [vmem:[%s2] sm:$0xff]
    %v71 = vld [vmem:[%s2 + $0x8] sm:$0xff]
    %v72 = vld [vmem:[%s2 + $0x10] sm:$0xff]
    %v73 = vld [vmem:[%s2 + $0x18] sm:$0xff]
    %v74 = vld [vmem:[%s3] sm:$0xff]
    %v75 = vld [vmem:[%s3 + $0x8] sm:$0xff]
    %v76 = vld [vmem:[%s3 + $0x10] sm:$0xff]
    %v77 = vld [vmem:[%s3 + $0x18] sm:$0xff]
    %v78 = vld [vmem:[%s4] sm:$0xff]
    %v79 = vld [vmem:[%s4 + $0x8] sm:$0xff]
    %v80 = vld [vmem:[%s4 + $0x10] sm:$0xff]
    %v81 = vld [vmem:[%s4 + $0x18] sm:$0xff]
    %v82 = vld [vmem:[%s5] sm:$0xff]
    %v83 = vld [vmem:[%s5 + $0x8] sm:$0xff]
    %v84 = vld [vmem:[%s5 + $0x10] sm:$0xff]
    %v85 = vld [vmem:[%s5 + $0x18] sm:$0xff]
    %v86 = vld [vmem:[%s5 + $0x20] sm:$0xff]
    %v87 = vld [vmem:[%s5 + $0x28] sm:$0xff]
    %v88 = vld [vmem:[%s5 + $0x30] sm:$0xff]
    %v89 = vld [vmem:[%s5 + $0x38] sm:$0xff]
    %v90 = vld [vmem:[#allocation2] sm:$0xff]
    %vm91 = vcmask 261120
    %v92 = vsel %vm91, %v60, 0.0
    %93 = vadd.xlane.f32.xlu0 %v92
    %v94 = vpop.xlane.xlu0 %93
    %v95 = vsel %vm91, %v61, 0.0
    %96 = vadd.xlane.f32.xlu0 %v95
    %v97 = vpop.xlane.xlu0 %96
    %v98 = vrcp.pop 32.0
    %v99 = vmul.f32 32.0, %v98
    %v100 = vsub.f32 1.0, %v99
    %v101 = vmul.f32 %v98, %v100
    %v102 = vadd.f32 %v98, %v101
    %vm103 = vweird.f32 %v98
    %v104 = vsel %vm103, %v98, %v102
    %v105 = vmul.f32 %v94, %v104
    %v106 = vmul.f32 %v97, %v104
    %v107 = vsub.f32 %v60, %v105
    %v108 = vsub.f32 %v61, %v106
    %v109 = vmul.f32 %v107, %v107
    %v110 = vmul.f32 %v108, %v108
    %v111 = vsel %vm91, %v109, 0.0
    %112 = vadd.xlane.f32.xlu0 %v111
    %v113 = vpop.xlane.xlu0 %112
    %v114 = vsel %vm91, %v110, 0.0
    %115 = vadd.xlane.f32.xlu0 %v114
    %v116 = vpop.xlane.xlu0 %115
    %v117 = vmul.f32 %v113, %v104
    %v118 = vmul.f32 %v116, %v104
    %v119 = vadd.f32 %v117, 1e-05
    %v120 = vadd.f32 %v118, 1e-05
    %v121 = vrsqrt.pop %v119
    %v122 = vmul.f32 %v121, %v119
    %v123 = vmul.f32 %v122, %v121
    %v124 = vmul.f32 0.5, %v123
    %v125 = vsub.f32 1.5, %v124
    %v126 = vmul.f32 %v121, %v125
    %vm127 = vweird.f32 %v119
    %vm128 = vweird.f32 %v121
    %vm129 = vmor %vm127, %vm128
    %v130 = vsel %vm129, %v121, %v126
    %v131 = vrsqrt.pop %v120
    %v132 = vmul.f32 %v131, %v120
    %v133 = vmul.f32 %v132, %v131
    %v134 = vmul.f32 0.5, %v133
    %v135 = vsub.f32 1.5, %v134
    %v136 = vmul.f32 %v131, %v135
    %vm137 = vweird.f32 %v120
    %vm138 = vweird.f32 %v131
    %vm139 = vmor %vm137, %vm138
    %v140 = vsel %vm139, %v131, %v136
    %v141 = vmul.f32 %v107, %v130
    %v142 = vmul.f32 %v108, %v140
    %v143 = vperm.slane %v90, 0
    %v144 = vmul.f32 %v141, %v143
    %v145 = vmul.f32 %v142, %v143
    %v146 = vperm.slane %v90, 1
    %v147 = vadd.f32 %v144, %v146
    %v148 = vadd.f32 %v145, %v146
    %v149 = vperm.slane %v90, 2
    %v151 = vsel %vm91, %v147, 0
    %v154 = vsel %vm91, %v148, 0
    %156 = vmatpush.msra.mxu0 0.0
    %157 = vmatpush.msra.mxu0 0.0
    %158 = vmatpush.msra.mxu0 0.0
    %159 = vmatpush.msra.mxu0 0.0
    %160 = vmatpush.msra.mxu0 0.0
    %161 = vmatpush.msra.mxu0 0.0
    %162 = vmatpush.msra.mxu0 0.0
    %163 = vmatpush.msra.mxu0 0.0
    %164 = vmatpush.msra.mxu0 0.0
    %165 = vmatpush.msra.mxu0 0.0
    %166 = vmatpush.msra.mxu0 0.0
    %167 = vmatpush.msra.mxu0 0.0
    %168 = vmatpush.msra.mxu0 %v73
    %169 = vmatpush.msra.mxu0 %v72
    %170 = vmatpush.msra.mxu0 %v71
    %171 = vmatpush.msra.mxu0 %v70
    %172 = vmatmul.f32.gmra.mxu0 %v151
    %v173 = vpop.f32.mrf.mxu0
    %v174 = vadd.f32 %v149, %v173
    %175 = vmatmul.f32.gmra.mxu0 %v154
    %v176 = vpop.f32.mrf.mxu0
    %v177 = vadd.f32 %v149, %v176
    %178 = vdwg.mxu0
    %180 = vrot.lane.b32.xlu0 %v174, 120
    %v181 = vpop.permute.xlu0 %180
    %183 = vrot.lane.b32.xlu0 %v174, 112
    %v184 = vpop.permute.xlu0 %183
    %186 = vrot.lane.b32.xlu0 %v174, 104
    %v187 = vpop.permute.xlu0 %186
    %190 = vrot.lane.b32.xlu0 %v177, 120
    %v191 = vpop.permute.xlu0 %190
    %193 = vrot.lane.b32.xlu0 %v177, 112
    %v194 = vpop.permute.xlu0 %193
    %196 = vrot.lane.b32.xlu0 %v177, 104
    %v197 = vpop.permute.xlu0 %196
    %v199 = vmul.f32 %v174, 0.35355338
    %v200 = vmul.f32 %v181, 0.35355338
    %v201 = vmul.f32 %v184, 0.35355338
    %v202 = vmul.f32 %v187, 0.35355338
    %v203 = vmul.f32 %v177, 0.35355338
    %v204 = vmul.f32 %v191, 0.35355338
    %v205 = vmul.f32 %v194, 0.35355338
    %v206 = vmul.f32 %v197, 0.35355338
    %v215 = vperm.slane %v62, 0
    %v216 = vperm.slane %v63, 0
    %v217 = vperm.slane %v64, 0
    %v218 = vperm.slane %v65, 0
    %v219 = vperm.slane %v66, 0
    %v220 = vperm.slane %v67, 0
    %v221 = vperm.slane %v68, 0
    %v222 = vperm.slane %v69, 0
    %231 = vrot.lane.b32.xlu0 %v174, 96
    %v232 = vpop.permute.xlu0 %231
    %vm233 = vcmask 64512
    %v235 = vsel %vm233, %v199, 0
    %v237 = vsel %vm233, %v232, 0
    %239 = vmatpush.xpose.msra.mxu0 0.0
    %240 = vmatpush.xpose.msra.mxu0 0.0
    %241 = vmatpush.xpose.msra.mxu0 0.0
    %242 = vmatpush.xpose.msra.mxu0 0.0
    %243 = vmatpush.xpose.msra.mxu0 0.0
    %244 = vmatpush.xpose.msra.mxu0 0.0
    %245 = vmatpush.xpose.msra.mxu0 0.0
    %246 = vmatpush.xpose.msra.mxu0 0.0
    %247 = vmatpush.xpose.msra.mxu0 0.0
    %248 = vmatpush.xpose.msra.mxu0 0.0
    %249 = vmatpush.xpose.msra.mxu0 0.0
    %250 = vmatpush.xpose.msra.mxu0 0.0
    %251 = vmatpush.xpose.msra.mxu0 0.0
    %252 = vmatpush.xpose.msra.mxu0 0.0
    %253 = vmatpush.xpose.msra.mxu0 0.0
    %254 = vmatpush.xpose.msra.mxu0 %v237
    %255 = vmatmul.f32.gmra.mxu0 %v235
    %v256 = vpop.f32.mrf.mxu0
    %v257 = vadd.f32 %v215, %v256
    %258 = vdwg.mxu0
    %259 = vrot.lane.b32.xlu0 %v181, 96
    %v260 = vpop.permute.xlu0 %259
    %v262 = vsel %vm233, %v200, 0
    %v264 = vsel %vm233, %v260, 0
    %266 = vmatpush.xpose.msra.mxu0 0.0
    %267 = vmatpush.xpose.msra.mxu0 0.0
    %268 = vmatpush.xpose.msra.mxu0 0.0
    %269 = vmatpush.xpose.msra.mxu0 0.0
    %270 = vmatpush.xpose.msra.mxu0 0.0
    %271 = vmatpush.xpose.msra.mxu0 0.0
    %272 = vmatpush.xpose.msra.mxu0 0.0
    %273 = vmatpush.xpose.msra.mxu0 0.0
    %274 = vmatpush.xpose.msra.mxu0 0.0
    %275 = vmatpush.xpose.msra.mxu0 0.0
    %276 = vmatpush.xpose.msra.mxu0 0.0
    %277 = vmatpush.xpose.msra.mxu0 0.0
    %278 = vmatpush.xpose.msra.mxu0 0.0
    %279 = vmatpush.xpose.msra.mxu0 0.0
    %280 = vmatpush.xpose.msra.mxu0 0.0
    %281 = vmatpush.xpose.msra.mxu0 %v264
    %282 = vmatmul.f32.gmra.mxu0 %v262
    %v283 = vpop.f32.mrf.mxu0
    %v284 = vadd.f32 %v216, %v283
    %285 = vdwg.mxu0
    %286 = vrot.lane.b32.xlu0 %v184, 96
    %v287 = vpop.permute.xlu0 %286
    %v289 = vsel %vm233, %v201, 0
    %v291 = vsel %vm233, %v287, 0
    %293 = vmatpush.xpose.msra.mxu0 0.0
    %294 = vmatpush.xpose.msra.mxu0 0.0
    %295 = vmatpush.xpose.msra.mxu0 0.0
    %296 = vmatpush.xpose.msra.mxu0 0.0
    %297 = vmatpush.xpose.msra.mxu0 0.0
    %298 = vmatpush.xpose.msra.mxu0 0.0
    %299 = vmatpush.xpose.msra.mxu0 0.0
    %300 = vmatpush.xpose.msra.mxu0 0.0
    %301 = vmatpush.xpose.msra.mxu0 0.0
    %302 = vmatpush.xpose.msra.mxu0 0.0
    %303 = vmatpush.xpose.msra.mxu0 0.0
    %304 = vmatpush.xpose.msra.mxu0 0.0
    %305 = vmatpush.xpose.msra.mxu0 0.0
    %306 = vmatpush.xpose.msra.mxu0 0.0
    %307 = vmatpush.xpose.msra.mxu0 0.0
    %308 = vmatpush.xpose.msra.mxu0 %v291
    %309 = vmatmul.f32.gmra.mxu0 %v289
    %v310 = vpop.f32.mrf.mxu0
    %v311 = vadd.f32 %v217, %v310
    %312 = vdwg.mxu0
    %313 = vrot.lane.b32.xlu0 %v187, 96
    %v314 = vpop.permute.xlu0 %313
    %v316 = vsel %vm233, %v202, 0
    %v318 = vsel %vm233, %v314, 0
    %320 = vmatpush.xpose.msra.mxu0 0.0
    %321 = vmatpush.xpose.msra.mxu0 0.0
    %322 = vmatpush.xpose.msra.mxu0 0.0
    %323 = vmatpush.xpose.msra.mxu0 0.0
    %324 = vmatpush.xpose.msra.mxu0 0.0
    %325 = vmatpush.xpose.msra.mxu0 0.0
    %326 = vmatpush.xpose.msra.mxu0 0.0
    %327 = vmatpush.xpose.msra.mxu0 0.0
    %328 = vmatpush.xpose.msra.mxu0 0.0
    %329 = vmatpush.xpose.msra.mxu0 0.0
    %330 = vmatpush.xpose.msra.mxu0 0.0
    %331 = vmatpush.xpose.msra.mxu0 0.0
    %332 = vmatpush.xpose.msra.mxu0 0.0
    %333 = vmatpush.xpose.msra.mxu0 0.0
    %334 = vmatpush.xpose.msra.mxu0 0.0
    %335 = vmatpush.xpose.msra.mxu0 %v318
    %336 = vmatmul.f32.gmra.mxu0 %v316
    %v337 = vpop.f32.mrf.mxu0
    %v338 = vadd.f32 %v218, %v337
    %339 = vdwg.mxu0
    %340 = vrot.lane.b32.xlu0 %v177, 96
    %v341 = vpop.permute.xlu0 %340
    %v343 = vsel %vm233, %v203, 0
    %v345 = vsel %vm233, %v341, 0
    %347 = vmatpush.xpose.msra.mxu0 0.0
    %348 = vmatpush.xpose.msra.mxu0 0.0
    %349 = vmatpush.xpose.msra.mxu0 0.0
    %350 = vmatpush.xpose.msra.mxu0 0.0
    %351 = vmatpush.xpose.msra.mxu0 0.0
    %352 = vmatpush.xpose.msra.mxu0 0.0
    %353 = vmatpush.xpose.msra.mxu0 0.0
    %354 = vmatpush.xpose.msra.mxu0 0.0
    %355 = vmatpush.xpose.msra.mxu0 0.0
    %356 = vmatpush.xpose.msra.mxu0 0.0
    %357 = vmatpush.xpose.msra.mxu0 0.0
    %358 = vmatpush.xpose.msra.mxu0 0.0
    %359 = vmatpush.xpose.msra.mxu0 0.0
    %360 = vmatpush.xpose.msra.mxu0 0.0
    %361 = vmatpush.xpose.msra.mxu0 0.0
    %362 = vmatpush.xpose.msra.mxu0 %v345
    %363 = vmatmul.f32.gmra.mxu0 %v343
    %v364 = vpop.f32.mrf.mxu0
    %v365 = vadd.f32 %v219, %v364
    %366 = vdwg.mxu0
    %367 = vrot.lane.b32.xlu0 %v191, 96
    %v368 = vpop.permute.xlu0 %367
    %v370 = vsel %vm233, %v204, 0
    %v372 = vsel %vm233, %v368, 0
    %374 = vmatpush.xpose.msra.mxu0 0.0
    %375 = vmatpush.xpose.msra.mxu0 0.0
    %376 = vmatpush.xpose.msra.mxu0 0.0
    %377 = vmatpush.xpose.msra.mxu0 0.0
    %378 = vmatpush.xpose.msra.mxu0 0.0
    %379 = vmatpush.xpose.msra.mxu0 0.0
    %380 = vmatpush.xpose.msra.mxu0 0.0
    %381 = vmatpush.xpose.msra.mxu0 0.0
    %382 = vmatpush.xpose.msra.mxu0 0.0
    %383 = vmatpush.xpose.msra.mxu0 0.0
    %384 = vmatpush.xpose.msra.mxu0 0.0
    %385 = vmatpush.xpose.msra.mxu0 0.0
    %386 = vmatpush.xpose.msra.mxu0 0.0
    %387 = vmatpush.xpose.msra.mxu0 0.0
    %388 = vmatpush.xpose.msra.mxu0 0.0
    %389 = vmatpush.xpose.msra.mxu0 %v372
    %390 = vmatmul.f32.gmra.mxu0 %v370
    %v391 = vpop.f32.mrf.mxu0
    %v392 = vadd.f32 %v220, %v391
    %393 = vdwg.mxu0
    %394 = vrot.lane.b32.xlu0 %v194, 96
    %v395 = vpop.permute.xlu0 %394
    %v397 = vsel %vm233, %v205, 0
    %v399 = vsel %vm233, %v395, 0
    %401 = vmatpush.xpose.msra.mxu0 0.0
    %402 = vmatpush.xpose.msra.mxu0 0.0
    %403 = vmatpush.xpose.msra.mxu0 0.0
    %404 = vmatpush.xpose.msra.mxu0 0.0
    %405 = vmatpush.xpose.msra.mxu0 0.0
    %406 = vmatpush.xpose.msra.mxu0 0.0
    %407 = vmatpush.xpose.msra.mxu0 0.0
    %408 = vmatpush.xpose.msra.mxu0 0.0
    %409 = vmatpush.xpose.msra.mxu0 0.0
    %410 = vmatpush.xpose.msra.mxu0 0.0
    %411 = vmatpush.xpose.msra.mxu0 0.0
    %412 = vmatpush.xpose.msra.mxu0 0.0
    %413 = vmatpush.xpose.msra.mxu0 0.0
    %414 = vmatpush.xpose.msra.mxu0 0.0
    %415 = vmatpush.xpose.msra.mxu0 0.0
    %416 = vmatpush.xpose.msra.mxu0 %v399
    %417 = vmatmul.f32.gmra.mxu0 %v397
    %v418 = vpop.f32.mrf.mxu0
    %v419 = vadd.f32 %v221, %v418
    %420 = vdwg.mxu0
    %421 = vrot.lane.b32.xlu0 %v197, 96
    %v422 = vpop.permute.xlu0 %421
    %v424 = vsel %vm233, %v206, 0
    %v426 = vsel %vm233, %v422, 0
    %428 = vmatpush.xpose.msra.mxu0 0.0
    %429 = vmatpush.xpose.msra.mxu0 0.0
    %430 = vmatpush.xpose.msra.mxu0 0.0
    %431 = vmatpush.xpose.msra.mxu0 0.0
    %432 = vmatpush.xpose.msra.mxu0 0.0
    %433 = vmatpush.xpose.msra.mxu0 0.0
    %434 = vmatpush.xpose.msra.mxu0 0.0
    %435 = vmatpush.xpose.msra.mxu0 0.0
    %436 = vmatpush.xpose.msra.mxu0 0.0
    %437 = vmatpush.xpose.msra.mxu0 0.0
    %438 = vmatpush.xpose.msra.mxu0 0.0
    %439 = vmatpush.xpose.msra.mxu0 0.0
    %440 = vmatpush.xpose.msra.mxu0 0.0
    %441 = vmatpush.xpose.msra.mxu0 0.0
    %442 = vmatpush.xpose.msra.mxu0 0.0
    %443 = vmatpush.xpose.msra.mxu0 %v426
    %444 = vmatmul.f32.gmra.mxu0 %v424
    %v445 = vpop.f32.mrf.mxu0
    %v446 = vadd.f32 %v222, %v445
    %447 = vdwg.mxu0
    %v448 = vsel %vm233, %v257, -inf
    %449 = vmax.xlane.f32.xlu0 %v448
    %v450 = vpop.xlane.xlu0 %449
    %v451 = vsel %vm233, %v284, -inf
    %452 = vmax.xlane.f32.xlu0 %v451
    %v453 = vpop.xlane.xlu0 %452
    %v454 = vsel %vm233, %v311, -inf
    %455 = vmax.xlane.f32.xlu0 %v454
    %v456 = vpop.xlane.xlu0 %455
    %v457 = vsel %vm233, %v338, -inf
    %458 = vmax.xlane.f32.xlu0 %v457
    %v459 = vpop.xlane.xlu0 %458
    %v460 = vsel %vm233, %v365, -inf
    %461 = vmax.xlane.f32.xlu0 %v460
    %v462 = vpop.xlane.xlu0 %461
    %v463 = vsel %vm233, %v392, -inf
    %464 = vmax.xlane.f32.xlu0 %v463
    %v465 = vpop.xlane.xlu0 %464
    %v466 = vsel %vm233, %v419, -inf
    %467 = vmax.xlane.f32.xlu0 %v466
    %v468 = vpop.xlane.xlu0 %467
    %v469 = vsel %vm233, %v446, -inf
    %470 = vmax.xlane.f32.xlu0 %v469
    %v471 = vpop.xlane.xlu0 %470
    %v472 = vsub.f32 %v257, %v450
    %v473 = vsub.f32 %v284, %v453
    %v474 = vsub.f32 %v311, %v456
    %v475 = vsub.f32 %v338, %v459
    %v476 = vsub.f32 %v365, %v462
    %v477 = vsub.f32 %v392, %v465
    %v478 = vsub.f32 %v419, %v468
    %v479 = vsub.f32 %v446, %v471
    %v480 = vmul.f32 %v472, 1.442695
    %v481 = vpow.pop %v480
    %v482 = vmul.f32 %v473, 1.442695
    %v483 = vpow.pop %v482
    %v484 = vmul.f32 %v474, 1.442695
    %v485 = vpow.pop %v484
    %v486 = vmul.f32 %v475, 1.442695
    %v487 = vpow.pop %v486
    %v488 = vmul.f32 %v476, 1.442695
    %v489 = vpow.pop %v488
    %v490 = vmul.f32 %v477, 1.442695
    %v491 = vpow.pop %v490
    %v492 = vmul.f32 %v478, 1.442695
    %v493 = vpow.pop %v492
    %v494 = vmul.f32 %v479, 1.442695
    %v495 = vpow.pop %v494
    %v496 = vsel %vm233, %v481, 0.0
    %497 = vadd.xlane.f32.xlu0 %v496
    %v498 = vpop.xlane.xlu0 %497
    %v499 = vsel %vm233, %v483, 0.0
    %500 = vadd.xlane.f32.xlu0 %v499
    %v501 = vpop.xlane.xlu0 %500
    %v502 = vsel %vm233, %v485, 0.0
    %503 = vadd.xlane.f32.xlu0 %v502
    %v504 = vpop.xlane.xlu0 %503
    %v505 = vsel %vm233, %v487, 0.0
    %506 = vadd.xlane.f32.xlu0 %v505
    %v507 = vpop.xlane.xlu0 %506
    %v508 = vsel %vm233, %v489, 0.0
    %509 = vadd.xlane.f32.xlu0 %v508
    %v510 = vpop.xlane.xlu0 %509
    %v511 = vsel %vm233, %v491, 0.0
    %512 = vadd.xlane.f32.xlu0 %v511
    %v513 = vpop.xlane.xlu0 %512
    %v514 = vsel %vm233, %v493, 0.0
    %515 = vadd.xlane.f32.xlu0 %v514
    %v516 = vpop.xlane.xlu0 %515
    %v517 = vsel %vm233, %v495, 0.0
    %518 = vadd.xlane.f32.xlu0 %v517
    %v519 = vpop.xlane.xlu0 %518
    %v520 = vrcp.pop %v498
    %v521 = vrcp.pop %v501
    %v522 = vrcp.pop %v504
    %v523 = vrcp.pop %v507
    %v524 = vrcp.pop %v510
    %v525 = vrcp.pop %v513
    %v526 = vrcp.pop %v516
    %v527 = vrcp.pop %v519
    %v528 = vmul.f32 %v481, %v520
    %v529 = vmul.f32 %v483, %v521
    %v530 = vmul.f32 %v485, %v522
    %v531 = vmul.f32 %v487, %v523
    %v532 = vmul.f32 %v489, %v524
    %v533 = vmul.f32 %v491, %v525
    %v534 = vmul.f32 %v493, %v526
    %v535 = vmul.f32 %v495, %v527
    %536 = vrot.lane.b32.xlu0 %v174, 64
    %v537 = vpop.permute.xlu0 %536
    %v540 = vsel %vm233, %v528, 0
    %542 = vmatpush.msra.mxu0 0.0
    %543 = vmatpush.msra.mxu0 0.0
    %544 = vmatpush.msra.mxu0 0.0
    %545 = vmatpush.msra.mxu0 0.0
    %546 = vmatpush.msra.mxu0 0.0
    %547 = vmatpush.msra.mxu0 0.0
    %548 = vmatpush.msra.mxu0 0.0
    %549 = vmatpush.msra.mxu0 0.0
    %550 = vmatpush.msra.mxu0 0.0
    %551 = vmatpush.msra.mxu0 0.0
    %552 = vmatpush.msra.mxu0 0.0
    %553 = vmatpush.msra.mxu0 0.0
    %554 = vmatpush.msra.mxu0 0.0
    %555 = vmatpush.msra.mxu0 0.0
    %556 = vmatpush.msra.mxu0 0.0
    %557 = vmatpush.msra.mxu0 %v537
    %558 = vmatmul.f32.gmra.mxu0 %v540
    %v559 = vpop.f32.mrf.mxu0
    %v560 = vadd.f32 0.0, %v559
    %561 = vdwg.mxu0
    %562 = vrot.lane.b32.xlu0 %v181, 64
    %v563 = vpop.permute.xlu0 %562
    %v566 = vsel %vm233, %v529, 0
    %568 = vmatpush.msra.mxu0 0.0
    %569 = vmatpush.msra.mxu0 0.0
    %570 = vmatpush.msra.mxu0 0.0
    %571 = vmatpush.msra.mxu0 0.0
    %572 = vmatpush.msra.mxu0 0.0
    %573 = vmatpush.msra.mxu0 0.0
    %574 = vmatpush.msra.mxu0 0.0
    %575 = vmatpush.msra.mxu0 0.0
    %576 = vmatpush.msra.mxu0 0.0
    %577 = vmatpush.msra.mxu0 0.0
    %578 = vmatpush.msra.mxu0 0.0
    %579 = vmatpush.msra.mxu0 0.0
    %580 = vmatpush.msra.mxu0 0.0
    %581 = vmatpush.msra.mxu0 0.0
    %582 = vmatpush.msra.mxu0 0.0
    %583 = vmatpush.msra.mxu0 %v563
    %584 = vmatmul.f32.gmra.mxu0 %v566
    %v585 = vpop.f32.mrf.mxu0
    %v586 = vadd.f32 0.0, %v585
    %587 = vdwg.mxu0
    %588 = vrot.lane.b32.xlu0 %v184, 64
    %v589 = vpop.permute.xlu0 %588
    %v592 = vsel %vm233, %v530, 0
    %594 = vmatpush.msra.mxu0 0.0
    %595 = vmatpush.msra.mxu0 0.0
    %596 = vmatpush.msra.mxu0 0.0
    %597 = vmatpush.msra.mxu0 0.0
    %598 = vmatpush.msra.mxu0 0.0
    %599 = vmatpush.msra.mxu0 0.0
    %600 = vmatpush.msra.mxu0 0.0
    %601 = vmatpush.msra.mxu0 0.0
    %602 = vmatpush.msra.mxu0 0.0
    %603 = vmatpush.msra.mxu0 0.0
    %604 = vmatpush.msra.mxu0 0.0
    %605 = vmatpush.msra.mxu0 0.0
    %606 = vmatpush.msra.mxu0 0.0
    %607 = vmatpush.msra.mxu0 0.0
    %608 = vmatpush.msra.mxu0 0.0
    %609 = vmatpush.msra.mxu0 %v589
    %610 = vmatmul.f32.gmra.mxu0 %v592
    %v611 = vpop.f32.mrf.mxu0
    %v612 = vadd.f32 0.0, %v611
    %613 = vdwg.mxu0
    %614 = vrot.lane.b32.xlu0 %v187, 64
    %v615 = vpop.permute.xlu0 %614
    %v618 = vsel %vm233, %v531, 0
    %620 = vmatpush.msra.mxu0 0.0
    %621 = vmatpush.msra.mxu0 0.0
    %622 = vmatpush.msra.mxu0 0.0
    %623 = vmatpush.msra.mxu0 0.0
    %624 = vmatpush.msra.mxu0 0.0
    %625 = vmatpush.msra.mxu0 0.0
    %626 = vmatpush.msra.mxu0 0.0
    %627 = vmatpush.msra.mxu0 0.0
    %628 = vmatpush.msra.mxu0 0.0
    %629 = vmatpush.msra.mxu0 0.0
    %630 = vmatpush.msra.mxu0 0.0
    %631 = vmatpush.msra.mxu0 0.0
    %632 = vmatpush.msra.mxu0 0.0
    %633 = vmatpush.msra.mxu0 0.0
    %634 = vmatpush.msra.mxu0 0.0
    %635 = vmatpush.msra.mxu0 %v615
    %636 = vmatmul.f32.gmra.mxu0 %v618
    %v637 = vpop.f32.mrf.mxu0
    %v638 = vadd.f32 0.0, %v637
    %639 = vdwg.mxu0
    %640 = vrot.lane.b32.xlu0 %v177, 64
    %v641 = vpop.permute.xlu0 %640
    %v644 = vsel %vm233, %v532, 0
    %646 = vmatpush.msra.mxu0 0.0
    %647 = vmatpush.msra.mxu0 0.0
    %648 = vmatpush.msra.mxu0 0.0
    %649 = vmatpush.msra.mxu0 0.0
    %650 = vmatpush.msra.mxu0 0.0
    %651 = vmatpush.msra.mxu0 0.0
    %652 = vmatpush.msra.mxu0 0.0
    %653 = vmatpush.msra.mxu0 0.0
    %654 = vmatpush.msra.mxu0 0.0
    %655 = vmatpush.msra.mxu0 0.0
    %656 = vmatpush.msra.mxu0 0.0
    %657 = vmatpush.msra.mxu0 0.0
    %658 = vmatpush.msra.mxu0 0.0
    %659 = vmatpush.msra.mxu0 0.0
    %660 = vmatpush.msra.mxu0 0.0
    %661 = vmatpush.msra.mxu0 %v641
    %662 = vmatmul.f32.gmra.mxu0 %v644
    %v663 = vpop.f32.mrf.mxu0
    %v664 = vadd.f32 0.0, %v663
    %665 = vdwg.mxu0
    %666 = vrot.lane.b32.xlu0 %v191, 64
    %v667 = vpop.permute.xlu0 %666
    %v670 = vsel %vm233, %v533, 0
    %672 = vmatpush.msra.mxu0 0.0
    %673 = vmatpush.msra.mxu0 0.0
    %674 = vmatpush.msra.mxu0 0.0
    %675 = vmatpush.msra.mxu0 0.0
    %676 = vmatpush.msra.mxu0 0.0
    %677 = vmatpush.msra.mxu0 0.0
    %678 = vmatpush.msra.mxu0 0.0
    %679 = vmatpush.msra.mxu0 0.0
    %680 = vmatpush.msra.mxu0 0.0
    %681 = vmatpush.msra.mxu0 0.0
    %682 = vmatpush.msra.mxu0 0.0
    %683 = vmatpush.msra.mxu0 0.0
    %684 = vmatpush.msra.mxu0 0.0
    %685 = vmatpush.msra.mxu0 0.0
    %686 = vmatpush.msra.mxu0 0.0
    %687 = vmatpush.msra.mxu0 %v667
    %688 = vmatmul.f32.gmra.mxu0 %v670
    %v689 = vpop.f32.mrf.mxu0
    %v690 = vadd.f32 0.0, %v689
    %691 = vdwg.mxu0
    %692 = vrot.lane.b32.xlu0 %v194, 64
    %v693 = vpop.permute.xlu0 %692
    %v696 = vsel %vm233, %v534, 0
    %698 = vmatpush.msra.mxu0 0.0
    %699 = vmatpush.msra.mxu0 0.0
    %700 = vmatpush.msra.mxu0 0.0
    %701 = vmatpush.msra.mxu0 0.0
    %702 = vmatpush.msra.mxu0 0.0
    %703 = vmatpush.msra.mxu0 0.0
    %704 = vmatpush.msra.mxu0 0.0
    %705 = vmatpush.msra.mxu0 0.0
    %706 = vmatpush.msra.mxu0 0.0
    %707 = vmatpush.msra.mxu0 0.0
    %708 = vmatpush.msra.mxu0 0.0
    %709 = vmatpush.msra.mxu0 0.0
    %710 = vmatpush.msra.mxu0 0.0
    %711 = vmatpush.msra.mxu0 0.0
    %712 = vmatpush.msra.mxu0 0.0
    %713 = vmatpush.msra.mxu0 %v693
    %714 = vmatmul.f32.gmra.mxu0 %v696
    %v715 = vpop.f32.mrf.mxu0
    %v716 = vadd.f32 0.0, %v715
    %717 = vdwg.mxu0
    %718 = vrot.lane.b32.xlu0 %v197, 64
    %v719 = vpop.permute.xlu0 %718
    %v722 = vsel %vm233, %v535, 0
    %724 = vmatpush.msra.mxu0 0.0
    %725 = vmatpush.msra.mxu0 0.0
    %726 = vmatpush.msra.mxu0 0.0
    %727 = vmatpush.msra.mxu0 0.0
    %728 = vmatpush.msra.mxu0 0.0
    %729 = vmatpush.msra.mxu0 0.0
    %730 = vmatpush.msra.mxu0 0.0
    %731 = vmatpush.msra.mxu0 0.0
    %732 = vmatpush.msra.mxu0 0.0
    %733 = vmatpush.msra.mxu0 0.0
    %734 = vmatpush.msra.mxu0 0.0
    %735 = vmatpush.msra.mxu0 0.0
    %736 = vmatpush.msra.mxu0 0.0
    %737 = vmatpush.msra.mxu0 0.0
    %738 = vmatpush.msra.mxu0 0.0
    %739 = vmatpush.msra.mxu0 %v719
    %740 = vmatmul.f32.gmra.mxu0 %v722
    %v741 = vpop.f32.mrf.mxu0
    %v742 = vadd.f32 0.0, %v741
    %743 = vdwg.mxu0
    %745 = vrot.lane.b32.xlu0 %v586, 8
    %v746 = vpop.permute.xlu0 %745
    %749 = vrot.lane.b32.xlu0 %v612, 16
    %v750 = vpop.permute.xlu0 %749
    %753 = vrot.lane.b32.xlu0 %v638, 24
    %v754 = vpop.permute.xlu0 %753
    %v756 = vsel %vm233, %v560, %v746
    %vm757 = vcmask 130048
    %v758 = vsel %vm757, %v756, %v750
    %vm759 = vcmask 195584
    %v760 = vsel %vm759, %v758, %v754
    %762 = vrot.lane.b32.xlu0 %v690, 8
    %v763 = vpop.permute.xlu0 %762
    %766 = vrot.lane.b32.xlu0 %v716, 16
    %v767 = vpop.permute.xlu0 %766
    %770 = vrot.lane.b32.xlu0 %v742, 24
    %v771 = vpop.permute.xlu0 %770
    %v773 = vsel %vm233, %v664, %v763
    %v774 = vsel %vm757, %v773, %v767
    %v775 = vsel %vm759, %v774, %v771
    %v776 = vperm.slane %v90, 3
    %v778 = vsel %vm91, %v760, 0
    %v781 = vsel %vm91, %v775, 0
    %783 = vmatpush.msra.mxu0 0.0
    %784 = vmatpush.msra.mxu0 0.0
    %785 = vmatpush.msra.mxu0 0.0
    %786 = vmatpush.msra.mxu0 0.0
    %787 = vmatpush.msra.mxu0 0.0
    %788 = vmatpush.msra.mxu0 0.0
    %789 = vmatpush.msra.mxu0 0.0
    %790 = vmatpush.msra.mxu0 0.0
    %791 = vmatpush.msra.mxu0 0.0
    %792 = vmatpush.msra.mxu0 0.0
    %793 = vmatpush.msra.mxu0 0.0
    %794 = vmatpush.msra.mxu0 0.0
    %795 = vmatpush.msra.mxu0 %v77
    %796 = vmatpush.msra.mxu0 %v76
    %797 = vmatpush.msra.mxu0 %v75
    %798 = vmatpush.msra.mxu0 %v74
    %799 = vmatmul.f32.gmra.mxu0 %v778
    %v800 = vpop.f32.mrf.mxu0
    %v801 = vadd.f32 %v776, %v800
    %802 = vmatmul.f32.gmra.mxu0 %v781
    %v803 = vpop.f32.mrf.mxu0
    %v804 = vadd.f32 %v776, %v803
    %805 = vdwg.mxu0
    %v806 = vadd.f32 %v60, %v801
    %v807 = vadd.f32 %v61, %v804
    %v808 = vsel %vm91, %v806, 0.0
    %809 = vadd.xlane.f32.xlu0 %v808
    %v810 = vpop.xlane.xlu0 %809
    %v811 = vsel %vm91, %v807, 0.0
    %812 = vadd.xlane.f32.xlu0 %v811
    %v813 = vpop.xlane.xlu0 %812
    %v814 = vmul.f32 %v810, %v104
    %v815 = vmul.f32 %v813, %v104
    %v816 = vsub.f32 %v806, %v814
    %v817 = vsub.f32 %v807, %v815
    %v818 = vmul.f32 %v816, %v816
    %v819 = vmul.f32 %v817, %v817
    %v820 = vsel %vm91, %v818, 0.0
    %821 = vadd.xlane.f32.xlu0 %v820
    %v822 = vpop.xlane.xlu0 %821
    %v823 = vsel %vm91, %v819, 0.0
    %824 = vadd.xlane.f32.xlu0 %v823
    %v825 = vpop.xlane.xlu0 %824
    %v826 = vmul.f32 %v822, %v104
    %v827 = vmul.f32 %v825, %v104
    %v828 = vadd.f32 %v826, 1e-05
    %v829 = vadd.f32 %v827, 1e-05
    %v830 = vrsqrt.pop %v828
    %v831 = vmul.f32 %v830, %v828
    %v832 = vmul.f32 %v831, %v830
    %v833 = vmul.f32 0.5, %v832
    %v834 = vsub.f32 1.5, %v833
    %v835 = vmul.f32 %v830, %v834
    %vm836 = vweird.f32 %v828
    %vm837 = vweird.f32 %v830
    %vm838 = vmor %vm836, %vm837
    %v839 = vsel %vm838, %v830, %v835
    %v840 = vrsqrt.pop %v829
    %v841 = vmul.f32 %v840, %v829
    %v842 = vmul.f32 %v841, %v840
    %v843 = vmul.f32 0.5, %v842
    %v844 = vsub.f32 1.5, %v843
    %v845 = vmul.f32 %v840, %v844
    %vm846 = vweird.f32 %v829
    %vm847 = vweird.f32 %v840
    %vm848 = vmor %vm846, %vm847
    %v849 = vsel %vm848, %v840, %v845
    %v850 = vmul.f32 %v816, %v839
    %v851 = vmul.f32 %v817, %v849
    %v852 = vperm.slane %v90, 4
    %v853 = vmul.f32 %v850, %v852
    %v854 = vmul.f32 %v851, %v852
    %v855 = vperm.slane %v90, 5
    %v856 = vadd.f32 %v853, %v855
    %v857 = vadd.f32 %v854, %v855
    %v858 = vperm.slane %v90, 6
    %v860 = vsel %vm91, %v856, 0
    %v863 = vsel %vm91, %v857, 0
    %865 = vmatpush.msra.mxu0 0.0
    %866 = vmatpush.msra.mxu0 0.0
    %867 = vmatpush.msra.mxu0 0.0
    %868 = vmatpush.msra.mxu0 0.0
    %869 = vmatpush.msra.mxu0 0.0
    %870 = vmatpush.msra.mxu0 0.0
    %871 = vmatpush.msra.mxu0 0.0
    %872 = vmatpush.msra.mxu0 0.0
    %873 = vmatpush.msra.mxu0 0.0
    %874 = vmatpush.msra.mxu0 0.0
    %875 = vmatpush.msra.mxu0 0.0
    %876 = vmatpush.msra.mxu0 0.0
    %877 = vmatpush.msra.mxu0 %v81
    %878 = vmatpush.msra.mxu0 %v80
    %879 = vmatpush.msra.mxu0 %v79
    %880 = vmatpush.msra.mxu0 %v78
    %881 = vmatmul.f32.gmra.mxu0 %v860
    %v882 = vpop.f32.mrf.mxu0
    %v883 = vadd.f32 %v858, %v882
    %884 = vmatmul.f32.gmra.mxu0 %v863
    %v885 = vpop.f32.mrf.mxu0
    %v886 = vadd.f32 %v858, %v885
    %887 = vdwg.mxu0
    %v888 = vmax.f32 %v883, 0.0
    %v889 = vmax.f32 %v886, 0.0
    %v890 = vperm.slane %v90, 7
    %vm891 = vcmask 523264
    %v893 = vsel %vm891, %v888, 0
    %v896 = vsel %vm891, %v889, 0
    %898 = vmatpush.msra.mxu0 0.0
    %899 = vmatpush.msra.mxu0 0.0
    %900 = vmatpush.msra.mxu0 0.0
    %901 = vmatpush.msra.mxu0 0.0
    %902 = vmatpush.msra.mxu0 0.0
    %903 = vmatpush.msra.mxu0 0.0
    %904 = vmatpush.msra.mxu0 0.0
    %905 = vmatpush.msra.mxu0 0.0
    %906 = vmatpush.msra.mxu0 %v89
    %907 = vmatpush.msra.mxu0 %v88
    %908 = vmatpush.msra.mxu0 %v87
    %909 = vmatpush.msra.mxu0 %v86
    %910 = vmatpush.msra.mxu0 %v85
    %911 = vmatpush.msra.mxu0 %v84
    %912 = vmatpush.msra.mxu0 %v83
    %913 = vmatpush.msra.mxu0 %v82
    %914 = vmatmul.f32.gmra.mxu0 %v893
    %v915 = vpop.f32.mrf.mxu0
    %v916 = vadd.f32 %v890, %v915
    %917 = vmatmul.f32.gmra.mxu0 %v896
    %v918 = vpop.f32.mrf.mxu0
    %v919 = vadd.f32 %v890, %v918
    %920 = vdwg.mxu0
    %v921 = vadd.f32 %v806, %v916
    %v922 = vadd.f32 %v807, %v919
    %s923 = scalar_lea.vmem %s2, 32
    %v924 = vld [vmem:[%s923] sm:$0xff]
    %v925 = vld [vmem:[%s923 + $0x8] sm:$0xff]
    %v926 = vld [vmem:[%s923 + $0x10] sm:$0xff]
    %v927 = vld [vmem:[%s923 + $0x18] sm:$0xff]
    %s928 = scalar_lea.vmem %s3, 32
    %v929 = vld [vmem:[%s928] sm:$0xff]
    %v930 = vld [vmem:[%s928 + $0x8] sm:$0xff]
    %v931 = vld [vmem:[%s928 + $0x10] sm:$0xff]
    %v932 = vld [vmem:[%s928 + $0x18] sm:$0xff]
    %s933 = scalar_lea.vmem %s4, 32
    %v934 = vld [vmem:[%s933] sm:$0xff]
    %v935 = vld [vmem:[%s933 + $0x8] sm:$0xff]
    %v936 = vld [vmem:[%s933 + $0x10] sm:$0xff]
    %v937 = vld [vmem:[%s933 + $0x18] sm:$0xff]
    %s938 = scalar_lea.vmem %s5, 64
    %v939 = vld [vmem:[%s938] sm:$0xff]
    %v940 = vld [vmem:[%s938 + $0x8] sm:$0xff]
    %v941 = vld [vmem:[%s938 + $0x10] sm:$0xff]
    %v942 = vld [vmem:[%s938 + $0x18] sm:$0xff]
    %v943 = vld [vmem:[%s938 + $0x20] sm:$0xff]
    %v944 = vld [vmem:[%s938 + $0x28] sm:$0xff]
    %v945 = vld [vmem:[%s938 + $0x30] sm:$0xff]
    %v946 = vld [vmem:[%s938 + $0x38] sm:$0xff]
    %s947 = scalar_lea.vmem [#allocation2], 8
    %v948 = vld [vmem:[%s947] sm:$0xff]
    %v949 = vsel %vm91, %v921, 0.0
    %950 = vadd.xlane.f32.xlu0 %v949
    %v951 = vpop.xlane.xlu0 %950
    %v952 = vsel %vm91, %v922, 0.0
    %953 = vadd.xlane.f32.xlu0 %v952
    %v954 = vpop.xlane.xlu0 %953
    %v955 = vmul.f32 %v951, %v104
    %v956 = vmul.f32 %v954, %v104
    %v957 = vsub.f32 %v921, %v955
    %v958 = vsub.f32 %v922, %v956
    %v959 = vmul.f32 %v957, %v957
    %v960 = vmul.f32 %v958, %v958
    %v961 = vsel %vm91, %v959, 0.0
    %962 = vadd.xlane.f32.xlu0 %v961
    %v963 = vpop.xlane.xlu0 %962
    %v964 = vsel %vm91, %v960, 0.0
    %965 = vadd.xlane.f32.xlu0 %v964
    %v966 = vpop.xlane.xlu0 %965
    %v967 = vmul.f32 %v963, %v104
    %v968 = vmul.f32 %v966, %v104
    %v969 = vadd.f32 %v967, 1e-05
    %v970 = vadd.f32 %v968, 1e-05
    %v971 = vrsqrt.pop %v969
    %v972 = vmul.f32 %v971, %v969
    %v973 = vmul.f32 %v972, %v971
    %v974 = vmul.f32 0.5, %v973
    %v975 = vsub.f32 1.5, %v974
    %v976 = vmul.f32 %v971, %v975
    %vm977 = vweird.f32 %v969
    %vm978 = vweird.f32 %v971
    %vm979 = vmor %vm977, %vm978
    %v980 = vsel %vm979, %v971, %v976
    %v981 = vrsqrt.pop %v970
    %v982 = vmul.f32 %v981, %v970
    %v983 = vmul.f32 %v982, %v981
    %v984 = vmul.f32 0.5, %v983
    %v985 = vsub.f32 1.5, %v984
    %v986 = vmul.f32 %v981, %v985
    %vm987 = vweird.f32 %v970
    %vm988 = vweird.f32 %v981
    %vm989 = vmor %vm987, %vm988
    %v990 = vsel %vm989, %v981, %v986
    %v991 = vmul.f32 %v957, %v980
    %v992 = vmul.f32 %v958, %v990
    %v993 = vperm.slane %v948, 0
    %v994 = vmul.f32 %v991, %v993
    %v995 = vmul.f32 %v992, %v993
    %v996 = vperm.slane %v948, 1
    %v997 = vadd.f32 %v994, %v996
    %v998 = vadd.f32 %v995, %v996
    %v999 = vperm.slane %v948, 2
    %v1001 = vsel %vm91, %v997, 0
    %v1004 = vsel %vm91, %v998, 0
    %1006 = vmatpush.msra.mxu0 0.0
    %1007 = vmatpush.msra.mxu0 0.0
    %1008 = vmatpush.msra.mxu0 0.0
    %1009 = vmatpush.msra.mxu0 0.0
    %1010 = vmatpush.msra.mxu0 0.0
    %1011 = vmatpush.msra.mxu0 0.0
    %1012 = vmatpush.msra.mxu0 0.0
    %1013 = vmatpush.msra.mxu0 0.0
    %1014 = vmatpush.msra.mxu0 0.0
    %1015 = vmatpush.msra.mxu0 0.0
    %1016 = vmatpush.msra.mxu0 0.0
    %1017 = vmatpush.msra.mxu0 0.0
    %1018 = vmatpush.msra.mxu0 %v927
    %1019 = vmatpush.msra.mxu0 %v926
    %1020 = vmatpush.msra.mxu0 %v925
    %1021 = vmatpush.msra.mxu0 %v924
    %1022 = vmatmul.f32.gmra.mxu0 %v1001
    %v1023 = vpop.f32.mrf.mxu0
    %v1024 = vadd.f32 %v999, %v1023
    %1025 = vmatmul.f32.gmra.mxu0 %v1004
    %v1026 = vpop.f32.mrf.mxu0
    %v1027 = vadd.f32 %v999, %v1026
    %1028 = vdwg.mxu0
    %1030 = vrot.lane.b32.xlu0 %v1024, 120
    %v1031 = vpop.permute.xlu0 %1030
    %1033 = vrot.lane.b32.xlu0 %v1024, 112
    %v1034 = vpop.permute.xlu0 %1033
    %1036 = vrot.lane.b32.xlu0 %v1024, 104
    %v1037 = vpop.permute.xlu0 %1036
    %1040 = vrot.lane.b32.xlu0 %v1027, 120
    %v1041 = vpop.permute.xlu0 %1040
    %1043 = vrot.lane.b32.xlu0 %v1027, 112
    %v1044 = vpop.permute.xlu0 %1043
    %1046 = vrot.lane.b32.xlu0 %v1027, 104
    %v1047 = vpop.permute.xlu0 %1046
    %v1049 = vmul.f32 %v1024, 0.35355338
    %v1050 = vmul.f32 %v1031, 0.35355338
    %v1051 = vmul.f32 %v1034, 0.35355338
    %v1052 = vmul.f32 %v1037, 0.35355338
    %v1053 = vmul.f32 %v1027, 0.35355338
    %v1054 = vmul.f32 %v1041, 0.35355338
    %v1055 = vmul.f32 %v1044, 0.35355338
    %v1056 = vmul.f32 %v1047, 0.35355338
    %1057 = vrot.lane.b32.xlu0 %v1024, 96
    %v1058 = vpop.permute.xlu0 %1057
    %v1060 = vsel %vm233, %v1049, 0
    %v1062 = vsel %vm233, %v1058, 0
    %1064 = vmatpush.xpose.msra.mxu0 0.0
    %1065 = vmatpush.xpose.msra.mxu0 0.0
    %1066 = vmatpush.xpose.msra.mxu0 0.0
    %1067 = vmatpush.xpose.msra.mxu0 0.0
    %1068 = vmatpush.xpose.msra.mxu0 0.0
    %1069 = vmatpush.xpose.msra.mxu0 0.0
    %1070 = vmatpush.xpose.msra.mxu0 0.0
    %1071 = vmatpush.xpose.msra.mxu0 0.0
    %1072 = vmatpush.xpose.msra.mxu0 0.0
    %1073 = vmatpush.xpose.msra.mxu0 0.0
    %1074 = vmatpush.xpose.msra.mxu0 0.0
    %1075 = vmatpush.xpose.msra.mxu0 0.0
    %1076 = vmatpush.xpose.msra.mxu0 0.0
    %1077 = vmatpush.xpose.msra.mxu0 0.0
    %1078 = vmatpush.xpose.msra.mxu0 0.0
    %1079 = vmatpush.xpose.msra.mxu0 %v1062
    %1080 = vmatmul.f32.gmra.mxu0 %v1060
    %v1081 = vpop.f32.mrf.mxu0
    %v1082 = vadd.f32 %v215, %v1081
    %1083 = vdwg.mxu0
    %1084 = vrot.lane.b32.xlu0 %v1031, 96
    %v1085 = vpop.permute.xlu0 %1084
    %v1087 = vsel %vm233, %v1050, 0
    %v1089 = vsel %vm233, %v1085, 0
    %1091 = vmatpush.xpose.msra.mxu0 0.0
    %1092 = vmatpush.xpose.msra.mxu0 0.0
    %1093 = vmatpush.xpose.msra.mxu0 0.0
    %1094 = vmatpush.xpose.msra.mxu0 0.0
    %1095 = vmatpush.xpose.msra.mxu0 0.0
    %1096 = vmatpush.xpose.msra.mxu0 0.0
    %1097 = vmatpush.xpose.msra.mxu0 0.0
    %1098 = vmatpush.xpose.msra.mxu0 0.0
    %1099 = vmatpush.xpose.msra.mxu0 0.0
    %1100 = vmatpush.xpose.msra.mxu0 0.0
    %1101 = vmatpush.xpose.msra.mxu0 0.0
    %1102 = vmatpush.xpose.msra.mxu0 0.0
    %1103 = vmatpush.xpose.msra.mxu0 0.0
    %1104 = vmatpush.xpose.msra.mxu0 0.0
    %1105 = vmatpush.xpose.msra.mxu0 0.0
    %1106 = vmatpush.xpose.msra.mxu0 %v1089
    %1107 = vmatmul.f32.gmra.mxu0 %v1087
    %v1108 = vpop.f32.mrf.mxu0
    %v1109 = vadd.f32 %v216, %v1108
    %1110 = vdwg.mxu0
    %1111 = vrot.lane.b32.xlu0 %v1034, 96
    %v1112 = vpop.permute.xlu0 %1111
    %v1114 = vsel %vm233, %v1051, 0
    %v1116 = vsel %vm233, %v1112, 0
    %1118 = vmatpush.xpose.msra.mxu0 0.0
    %1119 = vmatpush.xpose.msra.mxu0 0.0
    %1120 = vmatpush.xpose.msra.mxu0 0.0
    %1121 = vmatpush.xpose.msra.mxu0 0.0
    %1122 = vmatpush.xpose.msra.mxu0 0.0
    %1123 = vmatpush.xpose.msra.mxu0 0.0
    %1124 = vmatpush.xpose.msra.mxu0 0.0
    %1125 = vmatpush.xpose.msra.mxu0 0.0
    %1126 = vmatpush.xpose.msra.mxu0 0.0
    %1127 = vmatpush.xpose.msra.mxu0 0.0
    %1128 = vmatpush.xpose.msra.mxu0 0.0
    %1129 = vmatpush.xpose.msra.mxu0 0.0
    %1130 = vmatpush.xpose.msra.mxu0 0.0
    %1131 = vmatpush.xpose.msra.mxu0 0.0
    %1132 = vmatpush.xpose.msra.mxu0 0.0
    %1133 = vmatpush.xpose.msra.mxu0 %v1116
    %1134 = vmatmul.f32.gmra.mxu0 %v1114
    %v1135 = vpop.f32.mrf.mxu0
    %v1136 = vadd.f32 %v217, %v1135
    %1137 = vdwg.mxu0
    %1138 = vrot.lane.b32.xlu0 %v1037, 96
    %v1139 = vpop.permute.xlu0 %1138
    %v1141 = vsel %vm233, %v1052, 0
    %v1143 = vsel %vm233, %v1139, 0
    %1145 = vmatpush.xpose.msra.mxu0 0.0
    %1146 = vmatpush.xpose.msra.mxu0 0.0
    %1147 = vmatpush.xpose.msra.mxu0 0.0
    %1148 = vmatpush.xpose.msra.mxu0 0.0
    %1149 = vmatpush.xpose.msra.mxu0 0.0
    %1150 = vmatpush.xpose.msra.mxu0 0.0
    %1151 = vmatpush.xpose.msra.mxu0 0.0
    %1152 = vmatpush.xpose.msra.mxu0 0.0
    %1153 = vmatpush.xpose.msra.mxu0 0.0
    %1154 = vmatpush.xpose.msra.mxu0 0.0
    %1155 = vmatpush.xpose.msra.mxu0 0.0
    %1156 = vmatpush.xpose.msra.mxu0 0.0
    %1157 = vmatpush.xpose.msra.mxu0 0.0
    %1158 = vmatpush.xpose.msra.mxu0 0.0
    %1159 = vmatpush.xpose.msra.mxu0 0.0
    %1160 = vmatpush.xpose.msra.mxu0 %v1143
    %1161 = vmatmul.f32.gmra.mxu0 %v1141
    %v1162 = vpop.f32.mrf.mxu0
    %v1163 = vadd.f32 %v218, %v1162
    %1164 = vdwg.mxu0
    %1165 = vrot.lane.b32.xlu0 %v1027, 96
    %v1166 = vpop.permute.xlu0 %1165
    %v1168 = vsel %vm233, %v1053, 0
    %v1170 = vsel %vm233, %v1166, 0
    %1172 = vmatpush.xpose.msra.mxu0 0.0
    %1173 = vmatpush.xpose.msra.mxu0 0.0
    %1174 = vmatpush.xpose.msra.mxu0 0.0
    %1175 = vmatpush.xpose.msra.mxu0 0.0
    %1176 = vmatpush.xpose.msra.mxu0 0.0
    %1177 = vmatpush.xpose.msra.mxu0 0.0
    %1178 = vmatpush.xpose.msra.mxu0 0.0
    %1179 = vmatpush.xpose.msra.mxu0 0.0
    %1180 = vmatpush.xpose.msra.mxu0 0.0
    %1181 = vmatpush.xpose.msra.mxu0 0.0
    %1182 = vmatpush.xpose.msra.mxu0 0.0
    %1183 = vmatpush.xpose.msra.mxu0 0.0
    %1184 = vmatpush.xpose.msra.mxu0 0.0
    %1185 = vmatpush.xpose.msra.mxu0 0.0
    %1186 = vmatpush.xpose.msra.mxu0 0.0
    %1187 = vmatpush.xpose.msra.mxu0 %v1170
    %1188 = vmatmul.f32.gmra.mxu0 %v1168
    %v1189 = vpop.f32.mrf.mxu0
    %v1190 = vadd.f32 %v219, %v1189
    %1191 = vdwg.mxu0
    %1192 = vrot.lane.b32.xlu0 %v1041, 96
    %v1193 = vpop.permute.xlu0 %1192
    %v1195 = vsel %vm233, %v1054, 0
    %v1197 = vsel %vm233, %v1193, 0
    %1199 = vmatpush.xpose.msra.mxu0 0.0
    %1200 = vmatpush.xpose.msra.mxu0 0.0
    %1201 = vmatpush.xpose.msra.mxu0 0.0
    %1202 = vmatpush.xpose.msra.mxu0 0.0
    %1203 = vmatpush.xpose.msra.mxu0 0.0
    %1204 = vmatpush.xpose.msra.mxu0 0.0
    %1205 = vmatpush.xpose.msra.mxu0 0.0
    %1206 = vmatpush.xpose.msra.mxu0 0.0
    %1207 = vmatpush.xpose.msra.mxu0 0.0
    %1208 = vmatpush.xpose.msra.mxu0 0.0
    %1209 = vmatpush.xpose.msra.mxu0 0.0
    %1210 = vmatpush.xpose.msra.mxu0 0.0
    %1211 = vmatpush.xpose.msra.mxu0 0.0
    %1212 = vmatpush.xpose.msra.mxu0 0.0
    %1213 = vmatpush.xpose.msra.mxu0 0.0
    %1214 = vmatpush.xpose.msra.mxu0 %v1197
    %1215 = vmatmul.f32.gmra.mxu0 %v1195
    %v1216 = vpop.f32.mrf.mxu0
    %v1217 = vadd.f32 %v220, %v1216
    %1218 = vdwg.mxu0
    %1219 = vrot.lane.b32.xlu0 %v1044, 96
    %v1220 = vpop.permute.xlu0 %1219
    %v1222 = vsel %vm233, %v1055, 0
    %v1224 = vsel %vm233, %v1220, 0
    %1226 = vmatpush.xpose.msra.mxu0 0.0
    %1227 = vmatpush.xpose.msra.mxu0 0.0
    %1228 = vmatpush.xpose.msra.mxu0 0.0
    %1229 = vmatpush.xpose.msra.mxu0 0.0
    %1230 = vmatpush.xpose.msra.mxu0 0.0
    %1231 = vmatpush.xpose.msra.mxu0 0.0
    %1232 = vmatpush.xpose.msra.mxu0 0.0
    %1233 = vmatpush.xpose.msra.mxu0 0.0
    %1234 = vmatpush.xpose.msra.mxu0 0.0
    %1235 = vmatpush.xpose.msra.mxu0 0.0
    %1236 = vmatpush.xpose.msra.mxu0 0.0
    %1237 = vmatpush.xpose.msra.mxu0 0.0
    %1238 = vmatpush.xpose.msra.mxu0 0.0
    %1239 = vmatpush.xpose.msra.mxu0 0.0
    %1240 = vmatpush.xpose.msra.mxu0 0.0
    %1241 = vmatpush.xpose.msra.mxu0 %v1224
    %1242 = vmatmul.f32.gmra.mxu0 %v1222
    %v1243 = vpop.f32.mrf.mxu0
    %v1244 = vadd.f32 %v221, %v1243
    %1245 = vdwg.mxu0
    %1246 = vrot.lane.b32.xlu0 %v1047, 96
    %v1247 = vpop.permute.xlu0 %1246
    %v1249 = vsel %vm233, %v1056, 0
    %v1251 = vsel %vm233, %v1247, 0
    %1253 = vmatpush.xpose.msra.mxu0 0.0
    %1254 = vmatpush.xpose.msra.mxu0 0.0
    %1255 = vmatpush.xpose.msra.mxu0 0.0
    %1256 = vmatpush.xpose.msra.mxu0 0.0
    %1257 = vmatpush.xpose.msra.mxu0 0.0
    %1258 = vmatpush.xpose.msra.mxu0 0.0
    %1259 = vmatpush.xpose.msra.mxu0 0.0
    %1260 = vmatpush.xpose.msra.mxu0 0.0
    %1261 = vmatpush.xpose.msra.mxu0 0.0
    %1262 = vmatpush.xpose.msra.mxu0 0.0
    %1263 = vmatpush.xpose.msra.mxu0 0.0
    %1264 = vmatpush.xpose.msra.mxu0 0.0
    %1265 = vmatpush.xpose.msra.mxu0 0.0
    %1266 = vmatpush.xpose.msra.mxu0 0.0
    %1267 = vmatpush.xpose.msra.mxu0 0.0
    %1268 = vmatpush.xpose.msra.mxu0 %v1251
    %1269 = vmatmul.f32.gmra.mxu0 %v1249
    %v1270 = vpop.f32.mrf.mxu0
    %v1271 = vadd.f32 %v222, %v1270
    %1272 = vdwg.mxu0
    %v1273 = vsel %vm233, %v1082, -inf
    %1274 = vmax.xlane.f32.xlu0 %v1273
    %v1275 = vpop.xlane.xlu0 %1274
    %v1276 = vsel %vm233, %v1109, -inf
    %1277 = vmax.xlane.f32.xlu0 %v1276
    %v1278 = vpop.xlane.xlu0 %1277
    %v1279 = vsel %vm233, %v1136, -inf
    %1280 = vmax.xlane.f32.xlu0 %v1279
    %v1281 = vpop.xlane.xlu0 %1280
    %v1282 = vsel %vm233, %v1163, -inf
    %1283 = vmax.xlane.f32.xlu0 %v1282
    %v1284 = vpop.xlane.xlu0 %1283
    %v1285 = vsel %vm233, %v1190, -inf
    %1286 = vmax.xlane.f32.xlu0 %v1285
    %v1287 = vpop.xlane.xlu0 %1286
    %v1288 = vsel %vm233, %v1217, -inf
    %1289 = vmax.xlane.f32.xlu0 %v1288
    %v1290 = vpop.xlane.xlu0 %1289
    %v1291 = vsel %vm233, %v1244, -inf
    %1292 = vmax.xlane.f32.xlu0 %v1291
    %v1293 = vpop.xlane.xlu0 %1292
    %v1294 = vsel %vm233, %v1271, -inf
    %1295 = vmax.xlane.f32.xlu0 %v1294
    %v1296 = vpop.xlane.xlu0 %1295
    %v1297 = vsub.f32 %v1082, %v1275
    %v1298 = vsub.f32 %v1109, %v1278
    %v1299 = vsub.f32 %v1136, %v1281
    %v1300 = vsub.f32 %v1163, %v1284
    %v1301 = vsub.f32 %v1190, %v1287
    %v1302 = vsub.f32 %v1217, %v1290
    %v1303 = vsub.f32 %v1244, %v1293
    %v1304 = vsub.f32 %v1271, %v1296
    %v1305 = vmul.f32 %v1297, 1.442695
    %v1306 = vpow.pop %v1305
    %v1307 = vmul.f32 %v1298, 1.442695
    %v1308 = vpow.pop %v1307
    %v1309 = vmul.f32 %v1299, 1.442695
    %v1310 = vpow.pop %v1309
    %v1311 = vmul.f32 %v1300, 1.442695
    %v1312 = vpow.pop %v1311
    %v1313 = vmul.f32 %v1301, 1.442695
    %v1314 = vpow.pop %v1313
    %v1315 = vmul.f32 %v1302, 1.442695
    %v1316 = vpow.pop %v1315
    %v1317 = vmul.f32 %v1303, 1.442695
    %v1318 = vpow.pop %v1317
    %v1319 = vmul.f32 %v1304, 1.442695
    %v1320 = vpow.pop %v1319
    %v1321 = vsel %vm233, %v1306, 0.0
    %1322 = vadd.xlane.f32.xlu0 %v1321
    %v1323 = vpop.xlane.xlu0 %1322
    %v1324 = vsel %vm233, %v1308, 0.0
    %1325 = vadd.xlane.f32.xlu0 %v1324
    %v1326 = vpop.xlane.xlu0 %1325
    %v1327 = vsel %vm233, %v1310, 0.0
    %1328 = vadd.xlane.f32.xlu0 %v1327
    %v1329 = vpop.xlane.xlu0 %1328
    %v1330 = vsel %vm233, %v1312, 0.0
    %1331 = vadd.xlane.f32.xlu0 %v1330
    %v1332 = vpop.xlane.xlu0 %1331
    %v1333 = vsel %vm233, %v1314, 0.0
    %1334 = vadd.xlane.f32.xlu0 %v1333
    %v1335 = vpop.xlane.xlu0 %1334
    %v1336 = vsel %vm233, %v1316, 0.0
    %1337 = vadd.xlane.f32.xlu0 %v1336
    %v1338 = vpop.xlane.xlu0 %1337
    %v1339 = vsel %vm233, %v1318, 0.0
    %1340 = vadd.xlane.f32.xlu0 %v1339
    %v1341 = vpop.xlane.xlu0 %1340
    %v1342 = vsel %vm233, %v1320, 0.0
    %1343 = vadd.xlane.f32.xlu0 %v1342
    %v1344 = vpop.xlane.xlu0 %1343
    %v1345 = vrcp.pop %v1323
    %v1346 = vrcp.pop %v1326
    %v1347 = vrcp.pop %v1329
    %v1348 = vrcp.pop %v1332
    %v1349 = vrcp.pop %v1335
    %v1350 = vrcp.pop %v1338
    %v1351 = vrcp.pop %v1341
    %v1352 = vrcp.pop %v1344
    %v1353 = vmul.f32 %v1306, %v1345
    %v1354 = vmul.f32 %v1308, %v1346
    %v1355 = vmul.f32 %v1310, %v1347
    %v1356 = vmul.f32 %v1312, %v1348
    %v1357 = vmul.f32 %v1314, %v1349
    %v1358 = vmul.f32 %v1316, %v1350
    %v1359 = vmul.f32 %v1318, %v1351
    %v1360 = vmul.f32 %v1320, %v1352
    %1361 = vrot.lane.b32.xlu0 %v1024, 64
    %v1362 = vpop.permute.xlu0 %1361
    %v1365 = vsel %vm233, %v1353, 0
    %1367 = vmatpush.msra.mxu0 0.0
    %1368 = vmatpush.msra.mxu0 0.0
    %1369 = vmatpush.msra.mxu0 0.0
    %1370 = vmatpush.msra.mxu0 0.0
    %1371 = vmatpush.msra.mxu0 0.0
    %1372 = vmatpush.msra.mxu0 0.0
    %1373 = vmatpush.msra.mxu0 0.0
    %1374 = vmatpush.msra.mxu0 0.0
    %1375 = vmatpush.msra.mxu0 0.0
    %1376 = vmatpush.msra.mxu0 0.0
    %1377 = vmatpush.msra.mxu0 0.0
    %1378 = vmatpush.msra.mxu0 0.0
    %1379 = vmatpush.msra.mxu0 0.0
    %1380 = vmatpush.msra.mxu0 0.0
    %1381 = vmatpush.msra.mxu0 0.0
    %1382 = vmatpush.msra.mxu0 %v1362
    %1383 = vmatmul.f32.gmra.mxu0 %v1365
    %v1384 = vpop.f32.mrf.mxu0
    %v1385 = vadd.f32 0.0, %v1384
    %1386 = vdwg.mxu0
    %1387 = vrot.lane.b32.xlu0 %v1031, 64
    %v1388 = vpop.permute.xlu0 %1387
    %v1391 = vsel %vm233, %v1354, 0
    %1393 = vmatpush.msra.mxu0 0.0
    %1394 = vmatpush.msra.mxu0 0.0
    %1395 = vmatpush.msra.mxu0 0.0
    %1396 = vmatpush.msra.mxu0 0.0
    %1397 = vmatpush.msra.mxu0 0.0
    %1398 = vmatpush.msra.mxu0 0.0
    %1399 = vmatpush.msra.mxu0 0.0
    %1400 = vmatpush.msra.mxu0 0.0
    %1401 = vmatpush.msra.mxu0 0.0
    %1402 = vmatpush.msra.mxu0 0.0
    %1403 = vmatpush.msra.mxu0 0.0
    %1404 = vmatpush.msra.mxu0 0.0
    %1405 = vmatpush.msra.mxu0 0.0
    %1406 = vmatpush.msra.mxu0 0.0
    %1407 = vmatpush.msra.mxu0 0.0
    %1408 = vmatpush.msra.mxu0 %v1388
    %1409 = vmatmul.f32.gmra.mxu0 %v1391
    %v1410 = vpop.f32.mrf.mxu0
    %v1411 = vadd.f32 0.0, %v1410
    %1412 = vdwg.mxu0
    %1413 = vrot.lane.b32.xlu0 %v1034, 64
    %v1414 = vpop.permute.xlu0 %1413
    %v1417 = vsel %vm233, %v1355, 0
    %1419 = vmatpush.msra.mxu0 0.0
    %1420 = vmatpush.msra.mxu0 0.0
    %1421 = vmatpush.msra.mxu0 0.0
    %1422 = vmatpush.msra.mxu0 0.0
    %1423 = vmatpush.msra.mxu0 0.0
    %1424 = vmatpush.msra.mxu0 0.0
    %1425 = vmatpush.msra.mxu0 0.0
    %1426 = vmatpush.msra.mxu0 0.0
    %1427 = vmatpush.msra.mxu0 0.0
    %1428 = vmatpush.msra.mxu0 0.0
    %1429 = vmatpush.msra.mxu0 0.0
    %1430 = vmatpush.msra.mxu0 0.0
    %1431 = vmatpush.msra.mxu0 0.0
    %1432 = vmatpush.msra.mxu0 0.0
    %1433 = vmatpush.msra.mxu0 0.0
    %1434 = vmatpush.msra.mxu0 %v1414
    %1435 = vmatmul.f32.gmra.mxu0 %v1417
    %v1436 = vpop.f32.mrf.mxu0
    %v1437 = vadd.f32 0.0, %v1436
    %1438 = vdwg.mxu0
    %1439 = vrot.lane.b32.xlu0 %v1037, 64
    %v1440 = vpop.permute.xlu0 %1439
    %v1443 = vsel %vm233, %v1356, 0
    %1445 = vmatpush.msra.mxu0 0.0
    %1446 = vmatpush.msra.mxu0 0.0
    %1447 = vmatpush.msra.mxu0 0.0
    %1448 = vmatpush.msra.mxu0 0.0
    %1449 = vmatpush.msra.mxu0 0.0
    %1450 = vmatpush.msra.mxu0 0.0
    %1451 = vmatpush.msra.mxu0 0.0
    %1452 = vmatpush.msra.mxu0 0.0
    %1453 = vmatpush.msra.mxu0 0.0
    %1454 = vmatpush.msra.mxu0 0.0
    %1455 = vmatpush.msra.mxu0 0.0
    %1456 = vmatpush.msra.mxu0 0.0
    %1457 = vmatpush.msra.mxu0 0.0
    %1458 = vmatpush.msra.mxu0 0.0
    %1459 = vmatpush.msra.mxu0 0.0
    %1460 = vmatpush.msra.mxu0 %v1440
    %1461 = vmatmul.f32.gmra.mxu0 %v1443
    %v1462 = vpop.f32.mrf.mxu0
    %v1463 = vadd.f32 0.0, %v1462
    %1464 = vdwg.mxu0
    %1465 = vrot.lane.b32.xlu0 %v1027, 64
    %v1466 = vpop.permute.xlu0 %1465
    %v1469 = vsel %vm233, %v1357, 0
    %1471 = vmatpush.msra.mxu0 0.0
    %1472 = vmatpush.msra.mxu0 0.0
    %1473 = vmatpush.msra.mxu0 0.0
    %1474 = vmatpush.msra.mxu0 0.0
    %1475 = vmatpush.msra.mxu0 0.0
    %1476 = vmatpush.msra.mxu0 0.0
    %1477 = vmatpush.msra.mxu0 0.0
    %1478 = vmatpush.msra.mxu0 0.0
    %1479 = vmatpush.msra.mxu0 0.0
    %1480 = vmatpush.msra.mxu0 0.0
    %1481 = vmatpush.msra.mxu0 0.0
    %1482 = vmatpush.msra.mxu0 0.0
    %1483 = vmatpush.msra.mxu0 0.0
    %1484 = vmatpush.msra.mxu0 0.0
    %1485 = vmatpush.msra.mxu0 0.0
    %1486 = vmatpush.msra.mxu0 %v1466
    %1487 = vmatmul.f32.gmra.mxu0 %v1469
    %v1488 = vpop.f32.mrf.mxu0
    %v1489 = vadd.f32 0.0, %v1488
    %1490 = vdwg.mxu0
    %1491 = vrot.lane.b32.xlu0 %v1041, 64
    %v1492 = vpop.permute.xlu0 %1491
    %v1495 = vsel %vm233, %v1358, 0
    %1497 = vmatpush.msra.mxu0 0.0
    %1498 = vmatpush.msra.mxu0 0.0
    %1499 = vmatpush.msra.mxu0 0.0
    %1500 = vmatpush.msra.mxu0 0.0
    %1501 = vmatpush.msra.mxu0 0.0
    %1502 = vmatpush.msra.mxu0 0.0
    %1503 = vmatpush.msra.mxu0 0.0
    %1504 = vmatpush.msra.mxu0 0.0
    %1505 = vmatpush.msra.mxu0 0.0
    %1506 = vmatpush.msra.mxu0 0.0
    %1507 = vmatpush.msra.mxu0 0.0
    %1508 = vmatpush.msra.mxu0 0.0
    %1509 = vmatpush.msra.mxu0 0.0
    %1510 = vmatpush.msra.mxu0 0.0
    %1511 = vmatpush.msra.mxu0 0.0
    %1512 = vmatpush.msra.mxu0 %v1492
    %1513 = vmatmul.f32.gmra.mxu0 %v1495
    %v1514 = vpop.f32.mrf.mxu0
    %v1515 = vadd.f32 0.0, %v1514
    %1516 = vdwg.mxu0
    %1517 = vrot.lane.b32.xlu0 %v1044, 64
    %v1518 = vpop.permute.xlu0 %1517
    %v1521 = vsel %vm233, %v1359, 0
    %1523 = vmatpush.msra.mxu0 0.0
    %1524 = vmatpush.msra.mxu0 0.0
    %1525 = vmatpush.msra.mxu0 0.0
    %1526 = vmatpush.msra.mxu0 0.0
    %1527 = vmatpush.msra.mxu0 0.0
    %1528 = vmatpush.msra.mxu0 0.0
    %1529 = vmatpush.msra.mxu0 0.0
    %1530 = vmatpush.msra.mxu0 0.0
    %1531 = vmatpush.msra.mxu0 0.0
    %1532 = vmatpush.msra.mxu0 0.0
    %1533 = vmatpush.msra.mxu0 0.0
    %1534 = vmatpush.msra.mxu0 0.0
    %1535 = vmatpush.msra.mxu0 0.0
    %1536 = vmatpush.msra.mxu0 0.0
    %1537 = vmatpush.msra.mxu0 0.0
    %1538 = vmatpush.msra.mxu0 %v1518
    %1539 = vmatmul.f32.gmra.mxu0 %v1521
    %v1540 = vpop.f32.mrf.mxu0
    %v1541 = vadd.f32 0.0, %v1540
    %1542 = vdwg.mxu0
    %1543 = vrot.lane.b32.xlu0 %v1047, 64
    %v1544 = vpop.permute.xlu0 %1543
    %v1547 = vsel %vm233, %v1360, 0
    %1549 = vmatpush.msra.mxu0 0.0
    %1550 = vmatpush.msra.mxu0 0.0
    %1551 = vmatpush.msra.mxu0 0.0
    %1552 = vmatpush.msra.mxu0 0.0
    %1553 = vmatpush.msra.mxu0 0.0
    %1554 = vmatpush.msra.mxu0 0.0
    %1555 = vmatpush.msra.mxu0 0.0
    %1556 = vmatpush.msra.mxu0 0.0
    %1557 = vmatpush.msra.mxu0 0.0
    %1558 = vmatpush.msra.mxu0 0.0
    %1559 = vmatpush.msra.mxu0 0.0
    %1560 = vmatpush.msra.mxu0 0.0
    %1561 = vmatpush.msra.mxu0 0.0
    %1562 = vmatpush.msra.mxu0 0.0
    %1563 = vmatpush.msra.mxu0 0.0
    %1564 = vmatpush.msra.mxu0 %v1544
    %1565 = vmatmul.f32.gmra.mxu0 %v1547
    %v1566 = vpop.f32.mrf.mxu0
    %v1567 = vadd.f32 0.0, %v1566
    %1568 = vdwg.mxu0
    %1570 = vrot.lane.b32.xlu0 %v1411, 8
    %v1571 = vpop.permute.xlu0 %1570
    %1574 = vrot.lane.b32.xlu0 %v1437, 16
    %v1575 = vpop.permute.xlu0 %1574
    %1578 = vrot.lane.b32.xlu0 %v1463, 24
    %v1579 = vpop.permute.xlu0 %1578
    %v1581 = vsel %vm233, %v1385, %v1571
    %v1582 = vsel %vm757, %v1581, %v1575
    %v1583 = vsel %vm759, %v1582, %v1579
    %1585 = vrot.lane.b32.xlu0 %v1515, 8
    %v1586 = vpop.permute.xlu0 %1585
    %1589 = vrot.lane.b32.xlu0 %v1541, 16
    %v1590 = vpop.permute.xlu0 %1589
    %1593 = vrot.lane.b32.xlu0 %v1567, 24
    %v1594 = vpop.permute.xlu0 %1593
    %v1596 = vsel %vm233, %v1489, %v1586
    %v1597 = vsel %vm757, %v1596, %v1590
    %v1598 = vsel %vm759, %v1597, %v1594
    %v1599 = vperm.slane %v948, 3
    %v1601 = vsel %vm91, %v1583, 0
    %v1604 = vsel %vm91, %v1598, 0
    %1606 = vmatpush.msra.mxu0 0.0
    %1607 = vmatpush.msra.mxu0 0.0
    %1608 = vmatpush.msra.mxu0 0.0
    %1609 = vmatpush.msra.mxu0 0.0
    %1610 = vmatpush.msra.mxu0 0.0
    %1611 = vmatpush.msra.mxu0 0.0
    %1612 = vmatpush.msra.mxu0 0.0
    %1613 = vmatpush.msra.mxu0 0.0
    %1614 = vmatpush.msra.mxu0 0.0
    %1615 = vmatpush.msra.mxu0 0.0
    %1616 = vmatpush.msra.mxu0 0.0
    %1617 = vmatpush.msra.mxu0 0.0
    %1618 = vmatpush.msra.mxu0 %v932
    %1619 = vmatpush.msra.mxu0 %v931
    %1620 = vmatpush.msra.mxu0 %v930
    %1621 = vmatpush.msra.mxu0 %v929
    %1622 = vmatmul.f32.gmra.mxu0 %v1601
    %v1623 = vpop.f32.mrf.mxu0
    %v1624 = vadd.f32 %v1599, %v1623
    %1625 = vmatmul.f32.gmra.mxu0 %v1604
    %v1626 = vpop.f32.mrf.mxu0
    %v1627 = vadd.f32 %v1599, %v1626
    %1628 = vdwg.mxu0
    %v1629 = vadd.f32 %v921, %v1624
    %v1630 = vadd.f32 %v922, %v1627
    %v1631 = vsel %vm91, %v1629, 0.0
    %1632 = vadd.xlane.f32.xlu0 %v1631
    %v1633 = vpop.xlane.xlu0 %1632
    %v1634 = vsel %vm91, %v1630, 0.0
    %1635 = vadd.xlane.f32.xlu0 %v1634
    %v1636 = vpop.xlane.xlu0 %1635
    %v1637 = vmul.f32 %v1633, %v104
    %v1638 = vmul.f32 %v1636, %v104
    %v1639 = vsub.f32 %v1629, %v1637
    %v1640 = vsub.f32 %v1630, %v1638
    %v1641 = vmul.f32 %v1639, %v1639
    %v1642 = vmul.f32 %v1640, %v1640
    %v1643 = vsel %vm91, %v1641, 0.0
    %1644 = vadd.xlane.f32.xlu0 %v1643
    %v1645 = vpop.xlane.xlu0 %1644
    %v1646 = vsel %vm91, %v1642, 0.0
    %1647 = vadd.xlane.f32.xlu0 %v1646
    %v1648 = vpop.xlane.xlu0 %1647
    %v1649 = vmul.f32 %v1645, %v104
    %v1650 = vmul.f32 %v1648, %v104
    %v1651 = vadd.f32 %v1649, 1e-05
    %v1652 = vadd.f32 %v1650, 1e-05
    %v1653 = vrsqrt.pop %v1651
    %v1654 = vmul.f32 %v1653, %v1651
    %v1655 = vmul.f32 %v1654, %v1653
    %v1656 = vmul.f32 0.5, %v1655
    %v1657 = vsub.f32 1.5, %v1656
    %v1658 = vmul.f32 %v1653, %v1657
    %vm1659 = vweird.f32 %v1651
    %vm1660 = vweird.f32 %v1653
    %vm1661 = vmor %vm1659, %vm1660
    %v1662 = vsel %vm1661, %v1653, %v1658
    %v1663 = vrsqrt.pop %v1652
    %v1664 = vmul.f32 %v1663, %v1652
    %v1665 = vmul.f32 %v1664, %v1663
    %v1666 = vmul.f32 0.5, %v1665
    %v1667 = vsub.f32 1.5, %v1666
    %v1668 = vmul.f32 %v1663, %v1667
    %vm1669 = vweird.f32 %v1652
    %vm1670 = vweird.f32 %v1663
    %vm1671 = vmor %vm1669, %vm1670
    %v1672 = vsel %vm1671, %v1663, %v1668
    %v1673 = vmul.f32 %v1639, %v1662
    %v1674 = vmul.f32 %v1640, %v1672
    %v1675 = vperm.slane %v948, 4
    %v1676 = vmul.f32 %v1673, %v1675
    %v1677 = vmul.f32 %v1674, %v1675
    %v1678 = vperm.slane %v948, 5
    %v1679 = vadd.f32 %v1676, %v1678
    %v1680 = vadd.f32 %v1677, %v1678
    %v1681 = vperm.slane %v948, 6
    %v1683 = vsel %vm91, %v1679, 0
    %v1686 = vsel %vm91, %v1680, 0
    %1688 = vmatpush.msra.mxu0 0.0
    %1689 = vmatpush.msra.mxu0 0.0
    %1690 = vmatpush.msra.mxu0 0.0
    %1691 = vmatpush.msra.mxu0 0.0
    %1692 = vmatpush.msra.mxu0 0.0
    %1693 = vmatpush.msra.mxu0 0.0
    %1694 = vmatpush.msra.mxu0 0.0
    %1695 = vmatpush.msra.mxu0 0.0
    %1696 = vmatpush.msra.mxu0 0.0
    %1697 = vmatpush.msra.mxu0 0.0
    %1698 = vmatpush.msra.mxu0 0.0
    %1699 = vmatpush.msra.mxu0 0.0
    %1700 = vmatpush.msra.mxu0 %v937
    %1701 = vmatpush.msra.mxu0 %v936
    %1702 = vmatpush.msra.mxu0 %v935
    %1703 = vmatpush.msra.mxu0 %v934
    %1704 = vmatmul.f32.gmra.mxu0 %v1683
    %v1705 = vpop.f32.mrf.mxu0
    %v1706 = vadd.f32 %v1681, %v1705
    %1707 = vmatmul.f32.gmra.mxu0 %v1686
    %v1708 = vpop.f32.mrf.mxu0
    %v1709 = vadd.f32 %v1681, %v1708
    %1710 = vdwg.mxu0
    %v1711 = vmax.f32 %v1706, 0.0
    %v1712 = vmax.f32 %v1709, 0.0
    %v1713 = vperm.slane %v948, 7
    %v1715 = vsel %vm891, %v1711, 0
    %v1718 = vsel %vm891, %v1712, 0
    %1720 = vmatpush.msra.mxu0 0.0
    %1721 = vmatpush.msra.mxu0 0.0
    %1722 = vmatpush.msra.mxu0 0.0
    %1723 = vmatpush.msra.mxu0 0.0
    %1724 = vmatpush.msra.mxu0 0.0
    %1725 = vmatpush.msra.mxu0 0.0
    %1726 = vmatpush.msra.mxu0 0.0
    %1727 = vmatpush.msra.mxu0 0.0
    %1728 = vmatpush.msra.mxu0 %v946
    %1729 = vmatpush.msra.mxu0 %v945
    %1730 = vmatpush.msra.mxu0 %v944
    %1731 = vmatpush.msra.mxu0 %v943
    %1732 = vmatpush.msra.mxu0 %v942
    %1733 = vmatpush.msra.mxu0 %v941
    %1734 = vmatpush.msra.mxu0 %v940
    %1735 = vmatpush.msra.mxu0 %v939
    %1736 = vmatmul.f32.gmra.mxu0 %v1715
    %v1737 = vpop.f32.mrf.mxu0
    %v1738 = vadd.f32 %v1713, %v1737
    %1739 = vmatmul.f32.gmra.mxu0 %v1718
    %v1740 = vpop.f32.mrf.mxu0
    %v1741 = vadd.f32 %v1713, %v1740
    %1742 = vdwg.mxu0
    %v1743 = vadd.f32 %v1629, %v1738
    %v1744 = vadd.f32 %v1630, %v1741
    %v1745 = vld [vmem:[#allocation5] sm:$0x3]
    %v1746 = vsel %vm91, %v1743, 0.0
    %1747 = vadd.xlane.f32.xlu0 %v1746
    %v1748 = vpop.xlane.xlu0 %1747
    %v1749 = vsel %vm91, %v1744, 0.0
    %1750 = vadd.xlane.f32.xlu0 %v1749
    %v1751 = vpop.xlane.xlu0 %1750
    %v1752 = vmul.f32 %v1748, %v104
    %v1753 = vmul.f32 %v1751, %v104
    %v1754 = vsub.f32 %v1743, %v1752
    %v1755 = vsub.f32 %v1744, %v1753
    %v1756 = vmul.f32 %v1754, %v1754
    %v1757 = vmul.f32 %v1755, %v1755
    %v1758 = vsel %vm91, %v1756, 0.0
    %1759 = vadd.xlane.f32.xlu0 %v1758
    %v1760 = vpop.xlane.xlu0 %1759
    %v1761 = vsel %vm91, %v1757, 0.0
    %1762 = vadd.xlane.f32.xlu0 %v1761
    %v1763 = vpop.xlane.xlu0 %1762
    %v1764 = vmul.f32 %v1760, %v104
    %v1765 = vmul.f32 %v1763, %v104
    %v1766 = vadd.f32 %v1764, 1e-05
    %v1767 = vadd.f32 %v1765, 1e-05
    %v1768 = vrsqrt.pop %v1766
    %v1769 = vmul.f32 %v1768, %v1766
    %v1770 = vmul.f32 %v1769, %v1768
    %v1771 = vmul.f32 0.5, %v1770
    %v1772 = vsub.f32 1.5, %v1771
    %v1773 = vmul.f32 %v1768, %v1772
    %vm1774 = vweird.f32 %v1766
    %vm1775 = vweird.f32 %v1768
    %vm1776 = vmor %vm1774, %vm1775
    %v1777 = vsel %vm1776, %v1768, %v1773
    %v1778 = vrsqrt.pop %v1767
    %v1779 = vmul.f32 %v1778, %v1767
    %v1780 = vmul.f32 %v1779, %v1778
    %v1781 = vmul.f32 0.5, %v1780
    %v1782 = vsub.f32 1.5, %v1781
    %v1783 = vmul.f32 %v1778, %v1782
    %vm1784 = vweird.f32 %v1767
    %vm1785 = vweird.f32 %v1778
    %vm1786 = vmor %vm1784, %vm1785
    %v1787 = vsel %vm1786, %v1778, %v1783
    %v1788 = vmul.f32 %v1754, %v1777
    %v1789 = vmul.f32 %v1755, %v1787
    %v1790 = vperm.slane %v1745, 0
    %v1791 = vmul.f32 %v1788, %v1790
    %v1792 = vmul.f32 %v1789, %v1790
    %v1793 = vperm.slane %v1745, 1
    %v1794 = vadd.f32 %v1791, %v1793
    %v1795 = vadd.f32 %v1792, %v1793
    %1796 = vst.msk [vmem:[#allocation7] sm:$0xff] %vm91, %v1794
    %1797 = vst.msk [vmem:[#allocation7 + $0x8] sm:$0xff] %vm91, %v1795
    // Predicated region
    $region42: #{transformer_encoder_forward.1} parent=1 // pred_check
      _
    $region43: #{transformer_encoder_forward.1} parent=1 // pred_check_branch
      %1799 = sbr.rel (0) target = $region45
    $region44: #{transformer_encoder_forward.1} parent=1 // pred_region
      %1801 = vsyncadd [#allocation4], 0
      %s1802 = sshll.u32 [#allocation7], 4
      %s1803 = int_to_ptr.vmem [resolvable:$true] %s1802
      %s1804 = sshll.u32 %s8, 4
      %s1805 = int_to_ptr.hbm [resolvable:$true] %s1804
      %1810 = dma.vmem_to_hbm [thread:$0]  %s1803, 256, %s1805, [#allocation4], 128, 128, 8
    $region45: #{transformer_encoder_forward.1} parent=1 // pred_fallthru
      _
    // Predicated region
    $region46: #{transformer_encoder_forward.1} parent=1 // pred_check
      _
    $region47: #{transformer_encoder_forward.1} parent=1 // pred_check_branch
      %1812 = sbr.rel (0) target = $region49
    $region48: #{transformer_encoder_forward.1} parent=1 // pred_region
      %1814 = dma.done [#allocation4], 256
    $region49: #{transformer_encoder_forward.1} parent=1 // pred_fallthru
      _
    %1815 = vsyncpa [#allocation3], 1
    %1816 = vsyncpa [#allocation6], 1
    %1817 = vsyncpa [#allocation4], 1

</llo_original>
